<compile_context>
chip_gen: v5e
topology: v5e:2x2
jax: 0.10.0
libtpu: 0.0.40
codegen_flags: <defaults>
</compile_context>

<pallas_src>
import jax
import jax.numpy as jnp
from jax.experimental import pallas as pl
from jax.experimental.pallas import tpu as pltpu

EPS = 1e-5


def bn_relu_kernel(x_ref, gamma_ref, beta_ref, o_ref):
    # x_ref:     (Cb, R)  channels on sublanes, R = N*H*W spatial samples on lanes
    # gamma_ref: (Cb, 1)
    # beta_ref:  (Cb, 1)
    x = x_ref[...]
    r = x.shape[1]
    inv_r = 1.0 / r

    # one-pass per-channel batch statistics (biased variance, as PyTorch BN
    # uses for normalization); lane reductions ride the XLU, off the VALU slot.
    s1 = jnp.sum(x, axis=1, keepdims=True)
    s2 = jnp.sum(x * x, axis=1, keepdims=True)
    mean = s1 * inv_r
    var = jnp.maximum(s2 * inv_r - mean * mean, 0.0)

    inv_std = jax.lax.rsqrt(var + EPS)          # EUP slot (effectively free)
    scale = gamma_ref[...] * inv_std            # (Cb, 1)
    shift = beta_ref[...] - mean * scale        # (Cb, 1)

    # normalize + affine + ReLU: x*scale + shift, then clamp at 0
    o_ref[...] = jnp.maximum(x * scale + shift, 0.0)


def batchnorm_relu(x_nchw, gamma, beta):
    """x_nchw: (N, C, H, W) float32.  gamma, beta: (C,) float32."""
    n, c, h, w = x_nchw.shape
    assert n == 1, "NCHW-native (C, HW) view assumes N == 1 (as in the module)"
    rows = n * h * w

    # NCHW-native flat view -> (C, rows): pure reshape, no transpose / no copy.
    x2d = x_nchw.reshape(c, rows)
    g2d = gamma.reshape(c, 1)
    b2d = beta.reshape(c, 1)

    # Split channels across (up to) 2 grid steps -> both TensorCores on v7x.
    n_blocks = 2 if (c % 2 == 0 and (c // 2) % 8 == 0) else 1
    cb = c // n_blocks

    out2d = pl.pallas_call(
        bn_relu_kernel,
        out_shape=jax.ShapeDtypeStruct((c, rows), x_nchw.dtype),
        grid=(n_blocks,),
        in_specs=[
            pl.BlockSpec((cb, rows), lambda i: (i, 0)),
            pl.BlockSpec((cb, 1), lambda i: (i, 0)),
            pl.BlockSpec((cb, 1), lambda i: (i, 0)),
        ],
        out_specs=pl.BlockSpec((cb, rows), lambda i: (i, 0)),
        compiler_params=pltpu.CompilerParams(
            dimension_semantics=("parallel",)
        ),
    )(x2d, g2d, b2d)

    # (C, rows) -> NCHW: again a free reshape.
    return out2d.reshape(n, c, h, w)


def reference(x_nchw, gamma, beta):
    # pure-JAX reference of training-mode BN + ReLU
    mean = jnp.mean(x_nchw, axis=(0, 2, 3), keepdims=True)
    var = jnp.mean((x_nchw - mean) ** 2, axis=(0, 2, 3), keepdims=True)
    y = (x_nchw - mean) * jax.lax.rsqrt(var + EPS)
    y = y * gamma.reshape(1, -1, 1, 1) + beta.reshape(1, -1, 1, 1)
    return jnp.maximum(y, 0.0)


if __name__ == "__main__":
    key = jax.random.PRNGKey(0)
    kx, kg, kb = jax.random.split(key, 3)

    N, C, H, W = 1, 1152, 7, 7  # shapes implied by the module
    x = jax.random.normal(kx, (N, C, H, W), dtype=jnp.float32)

    # deterministic synthetic BN parameters (affine=True)
    gamma = 1.0 + 0.1 * jax.random.normal(kg, (C,), dtype=jnp.float32)
    beta = 0.1 * jax.random.normal(kb, (C,), dtype=jnp.float32)

    out = batchnorm_relu(x, gamma, beta)
    out = jax.block_until_ready(out)

    ref = reference(x, gamma, beta)
    assert out.shape == (N, C, H, W)
    assert jnp.max(jnp.abs(out - ref)) < 1e-4

    print("KERNEL_OK")
</pallas_src>

<mosaic_0001>
module attributes {stable_mosaic.version = 11 : i64} {
  func.func @bn_relu_kernel(%arg0: i32, %arg1: memref<576x49xf32, #tpu.memory_space<vmem>>, %arg2: memref<576x1xf32, #tpu.memory_space<vmem>>, %arg3: memref<576x1xf32, #tpu.memory_space<vmem>>, %arg4: memref<576x49xf32, #tpu.memory_space<vmem>>) attributes {dimension_semantics = [#tpu.dimension_semantics<parallel>], iteration_bounds = array<i64: 2>, scalar_prefetch = 0 : i64, scratch_operands = 0 : i64, tpu.core_type = #tpu.core_type<tc>, window_params = [{transform_indices = @transform_0, window_bounds = array<i64: 576, 49>}, {transform_indices = @transform_1, window_bounds = array<i64: 576, 1>}, {transform_indices = @transform_2, window_bounds = array<i64: 576, 1>}, {transform_indices = @transform_3, window_bounds = array<i64: 576, 49>}]} {
    %c0 = arith.constant 0 : index
    %c0_0 = arith.constant 0 : index
    %0 = vector.load %arg1[%c0, %c0_0] : memref<576x49xf32, #tpu.memory_space<vmem>>, vector<576x49xf32>
    %cst = arith.constant dense<0.000000e+00> : vector<576xf32>
    %1 = vector.multi_reduction <add>, %0, %cst [1] : vector<576x49xf32> to vector<576xf32>
    %2 = vector.shape_cast %1 : vector<576xf32> to vector<576x1xf32>
    %3 = arith.mulf %0, %0 : vector<576x49xf32>
    %cst_1 = arith.constant dense<0.000000e+00> : vector<576xf32>
    %4 = vector.multi_reduction <add>, %3, %cst_1 [1] : vector<576x49xf32> to vector<576xf32>
    %5 = vector.shape_cast %4 : vector<576xf32> to vector<576x1xf32>
    %cst_2 = arith.constant 0.0204081628 : f32
    %6 = vector.broadcast %cst_2 : f32 to vector<576x1xf32>
    %7 = arith.mulf %2, %6 : vector<576x1xf32>
    %cst_3 = arith.constant 0.0204081628 : f32
    %8 = vector.broadcast %cst_3 : f32 to vector<576x1xf32>
    %9 = arith.mulf %5, %8 : vector<576x1xf32>
    %10 = arith.mulf %7, %7 : vector<576x1xf32>
    %11 = arith.subf %9, %10 : vector<576x1xf32>
    %cst_4 = arith.constant 0.000000e+00 : f32
    %12 = vector.broadcast %cst_4 : f32 to vector<576x1xf32>
    %13 = arith.maximumf %11, %12 : vector<576x1xf32>
    %cst_5 = arith.constant 9.99999974E-6 : f32
    %14 = vector.broadcast %cst_5 : f32 to vector<576x1xf32>
    %15 = arith.addf %13, %14 : vector<576x1xf32>
    %16 = math.rsqrt %15 : vector<576x1xf32>
    %c0_6 = arith.constant 0 : index
    %c0_7 = arith.constant 0 : index
    %17 = vector.load %arg2[%c0_6, %c0_7] : memref<576x1xf32, #tpu.memory_space<vmem>>, vector<576x1xf32>
    %18 = arith.mulf %17, %16 : vector<576x1xf32>
    %c0_8 = arith.constant 0 : index
    %c0_9 = arith.constant 0 : index
    %19 = vector.load %arg3[%c0_8, %c0_9] : memref<576x1xf32, #tpu.memory_space<vmem>>, vector<576x1xf32>
    %20 = arith.mulf %7, %18 : vector<576x1xf32>
    %21 = arith.subf %19, %20 : vector<576x1xf32>
    %22 = vector.broadcast %18 : vector<576x1xf32> to vector<576x49xf32>
    %23 = arith.mulf %0, %22 : vector<576x49xf32>
    %24 = vector.broadcast %21 : vector<576x1xf32> to vector<576x49xf32>
    %25 = arith.addf %23, %24 : vector<576x49xf32>
    %cst_10 = arith.constant 0.000000e+00 : f32
    %26 = vector.broadcast %cst_10 : f32 to vector<576x49xf32>
    %27 = arith.maximumf %25, %26 : vector<576x49xf32>
    %c0_11 = arith.constant 0 : index
    %c0_12 = arith.constant 0 : index
    %28 = vector.load %arg4[%c0_11, %c0_12] : memref<576x49xf32, #tpu.memory_space<vmem>>, vector<576x49xf32>
    tpu.vector_store %arg4[%c0_11, %c0_12], %27 {strides = array<i32>} : memref<576x49xf32, #tpu.memory_space<vmem>>, vector<576x49xf32>,
    return
  }
  func.func @transform_0(%arg0: i32) -> (i32, i32) {
    %c0_i32 = arith.constant 0 : i32
    %c0_i32_0 = arith.constant 0 : i32
    return %arg0, %c0_i32 : i32, i32
  }
  func.func @transform_1(%arg0: i32) -> (i32, i32) {
    %c0_i32 = arith.constant 0 : i32
    %c0_i32_0 = arith.constant 0 : i32
    return %arg0, %c0_i32 : i32, i32
  }
  func.func @transform_2(%arg0: i32) -> (i32, i32) {
    %c0_i32 = arith.constant 0 : i32
    %c0_i32_0 = arith.constant 0 : i32
    return %arg0, %c0_i32 : i32, i32
  }
  func.func @transform_3(%arg0: i32) -> (i32, i32) {
    %c0_i32 = arith.constant 0 : i32
    %c0_i32_0 = arith.constant 0 : i32
    return %arg0, %c0_i32 : i32, i32
  }
}

</mosaic_0001>

<llo_original>
// kernel: tpu_custom_call.1
$region0: #{tpu_custom_call.1}
  #allocation0 [shape = 'u32[]', space=smem, size = 0x4, offset = 0x4, fixed_abs, tag = 'smem constant byte address 0x4 - core index']
  #allocation1 [shape = 'u32[72,128]{1,0:T(1,128)}', space=vmem, size = 0x9000, scoped, tag = 'internal scratch']
  %s0 = inlined_call_operand.vmem [shape: f32[1152,49], index: 0, kind: input, shape index: {}]
  %s1 = inlined_call_operand.vmem [shape: f32[1152,1], index: 1, kind: input, shape index: {}]
  %s2 = inlined_call_operand.vmem [shape: f32[1152,1], index: 2, kind: input, shape index: {}]
  %s3 = inlined_call_operand.vmem [shape: f32[1152,49], index: 3, kind: output, shape index: {}]
  %s4 = sld [smem:[#allocation0]]
  $region45: #{tpu_custom_call.1} parent=0
    _
  %s6 = ssub.s32 1, %s4
  %s7 = scalar_select 0, %s6, %s4
  loop: start=0, step=1, limit=4
  $region2: #{tpu_custom_call.1} parent=0 // loop_pre_header
    _
  $region3: #{tpu_custom_call.1} parent=0 // loop_header
    %s9 = sphi 0, %s13
    %p10 = scmp.ge.s32.totalorder %s9, 4
    %s19 = sphi 0, %s21
    %s22 = sphi 0, %s19
    %s23 = sphi 0, %s22
    %s39 = sphi 0, %s23
    %s45 = sphi 0, %s47
    %s48 = sphi 0, %s45
    %s49 = sphi 0, %s48
    %s65 = sphi 0, %s49
    %s71 = sphi 0, %s73
    %s74 = sphi 0, %s71
    %s75 = sphi 0, %s74
    %s91 = sphi 0, %s75
    %s97 = sphi 0, %s99
    %s100 = sphi 0, %s97
    %s101 = sphi 0, %s100
    %s117 = sphi 0, %s101
  $region4: #{tpu_custom_call.1} parent=0 // loop_header_branch
    %12 = sbr.rel (%p10) target = $region8
  $region5: #{tpu_custom_call.1} parent=0 // loop_body
    %s14 = ssub.s32 %s9, 1
    %s15 = ssub.s32 %s9, 2
    %s16 = sadd.s32 %s9, 1
    %s17 = ssub.s32 %s9, %s16
    %p18 = scmp.eq.s32.totalorder %s17, 0
    %s20 = sadd.s32 %s19, 1
    %s21 = scalar_select %p18, %s19, %s20
    %p24 = pneg %p18
    %p25 = scmp.eq.s32.totalorder %s9, 1
    %p26 = por %p24, %p25
    %p27 = scmp.ne.s32.totalorder %s19, %s22
    %p28 = scmp.eq.s32.totalorder %s9, 0
    %p29 = por %p27, %p28
    %p30 = scmp.ne.s32.totalorder %s19, %s22
    %p31 = scmp.eq.s32.totalorder %s14, 1
    %p32 = por %p30, %p31
    %p33 = scmp.ne.s32.totalorder %s22, %s23
    %p34 = scmp.eq.s32.totalorder %s14, 0
    %p35 = por %p33, %p34
    %p36 = scmp.ne.s32.totalorder %s22, %s23
    %p37 = scmp.eq.s32.totalorder %s15, 1
    %p38 = por %p36, %p37
    %p40 = scmp.ne.s32.totalorder %s23, %s39
    %p41 = scmp.eq.s32.totalorder %s15, 0
    %p42 = por %p40, %p41
    %s43 = ssub.s32 %s9, %s16
    %p44 = scmp.eq.s32.totalorder %s43, 0
    %s46 = sadd.s32 %s45, 1
    %s47 = scalar_select %p44, %s45, %s46
    %p50 = pneg %p44
    %p51 = scmp.eq.s32.totalorder %s9, 1
    %p52 = por %p50, %p51
    %p53 = scmp.ne.s32.totalorder %s45, %s48
    %p54 = scmp.eq.s32.totalorder %s9, 0
    %p55 = por %p53, %p54
    %p56 = scmp.ne.s32.totalorder %s45, %s48
    %p57 = scmp.eq.s32.totalorder %s14, 1
    %p58 = por %p56, %p57
    %p59 = scmp.ne.s32.totalorder %s48, %s49
    %p60 = scmp.eq.s32.totalorder %s14, 0
    %p61 = por %p59, %p60
    %p62 = scmp.ne.s32.totalorder %s48, %s49
    %p63 = scmp.eq.s32.totalorder %s15, 1
    %p64 = por %p62, %p63
    %p66 = scmp.ne.s32.totalorder %s49, %s65
    %p67 = scmp.eq.s32.totalorder %s15, 0
    %p68 = por %p66, %p67
    %s69 = ssub.s32 %s9, %s16
    %p70 = scmp.eq.s32.totalorder %s69, 0
    %s72 = sadd.s32 %s71, 1
    %s73 = scalar_select %p70, %s71, %s72
    %p76 = pneg %p70
    %p77 = scmp.eq.s32.totalorder %s9, 1
    %p78 = por %p76, %p77
    %p79 = scmp.ne.s32.totalorder %s71, %s74
    %p80 = scmp.eq.s32.totalorder %s9, 0
    %p81 = por %p79, %p80
    %p82 = scmp.ne.s32.totalorder %s71, %s74
    %p83 = scmp.eq.s32.totalorder %s14, 1
    %p84 = por %p82, %p83
    %p85 = scmp.ne.s32.totalorder %s74, %s75
    %p86 = scmp.eq.s32.totalorder %s14, 0
    %p87 = por %p85, %p86
    %p88 = scmp.ne.s32.totalorder %s74, %s75
    %p89 = scmp.eq.s32.totalorder %s15, 1
    %p90 = por %p88, %p89
    %p92 = scmp.ne.s32.totalorder %s75, %s91
    %p93 = scmp.eq.s32.totalorder %s15, 0
    %p94 = por %p92, %p93
    %s95 = ssub.s32 %s9, %s16
    %p96 = scmp.eq.s32.totalorder %s95, 0
    %s98 = sadd.s32 %s97, 1
    %s99 = scalar_select %p96, %s97, %s98
    %p102 = pneg %p96
    %p103 = scmp.eq.s32.totalorder %s9, 1
    %p104 = por %p102, %p103
    %p105 = scmp.ne.s32.totalorder %s97, %s100
    %p106 = scmp.eq.s32.totalorder %s9, 0
    %p107 = por %p105, %p106
    %p108 = scmp.ne.s32.totalorder %s97, %s100
    %p109 = scmp.eq.s32.totalorder %s14, 1
    %p110 = por %p108, %p109
    %p111 = scmp.ne.s32.totalorder %s100, %s101
    %p112 = scmp.eq.s32.totalorder %s14, 0
    %p113 = por %p111, %p112
    %p114 = scmp.ne.s32.totalorder %s100, %s101
    %p115 = scmp.eq.s32.totalorder %s15, 1
    %p116 = por %p114, %p115
    %p118 = scmp.ne.s32.totalorder %s101, %s117
    %p119 = scmp.eq.s32.totalorder %s15, 0
    %p120 = por %p118, %p119
    %p121 = scmp.le.s32.totalorder 1, %s9
    %p122 = scmp.lt.s32.totalorder %s9, 3
    %p123 = pnand %p121, %p122
    %p124 = pneg %p123
    // Predicated region
    $region9: #{tpu_custom_call.1} parent=5 // pred_check
      _
    $region10: #{tpu_custom_call.1} parent=5 // pred_check_branch
      %126 = sbr.rel (%p123) target = $region12
    $region11: #{tpu_custom_call.1} parent=5 // pred_region
      %s127 = ssub.s32 %s9, 1
    $region12: #{tpu_custom_call.1} parent=5 // pred_fallthru
      _
    %p128 = scmp.lt.s32.totalorder %s9, 2
    // Predicated region
    $region13: #{tpu_custom_call.1} parent=5 // pred_check
      %p129 = pneg %p128
    $region14: #{tpu_custom_call.1} parent=5 // pred_check_branch
      %131 = sbr.rel (%p129) target = $region16
    $region15: #{tpu_custom_call.1} parent=5 // pred_region
      // Predicated region
      $region17: #{tpu_custom_call.1} parent=15 // pred_check
        %p132 = pneg %p29
      $region18: #{tpu_custom_call.1} parent=15 // pred_check_branch
        %134 = sbr.rel (%p132) target = $region20
      $region19: #{tpu_custom_call.1} parent=15 // pred_region
        %s135 = smul.u32 72, %s9
        %p136 = scmp.lt.s32.totalorder %s135, 143
        %s137 = scalar_select %p136, %s135, 143
        %s138 = smul.addr %s137, 8
        %s139 = scalar_lea.vmem %s0, %s138
        %s140 = smul.u32 72, %s9
      $region20: #{tpu_custom_call.1} parent=15 // pred_fallthru
        _
      // Predicated region
      $region21: #{tpu_custom_call.1} parent=15 // pred_check
        %p141 = pneg %p55
      $region22: #{tpu_custom_call.1} parent=15 // pred_check_branch
        %143 = sbr.rel (%p141) target = $region24
      $region23: #{tpu_custom_call.1} parent=15 // pred_region
        %s144 = smul.u32 72, %s9
        %p145 = scmp.lt.s32.totalorder %s144, 143
        %s146 = scalar_select %p145, %s144, 143
        %s147 = smul.addr %s146, 8
        %s148 = scalar_lea.vmem %s1, %s147
        %s149 = smul.u32 72, %s9
      $region24: #{tpu_custom_call.1} parent=15 // pred_fallthru
        _
      // Predicated region
      $region25: #{tpu_custom_call.1} parent=15 // pred_check
        %p150 = pneg %p81
      $region26: #{tpu_custom_call.1} parent=15 // pred_check_branch
        %152 = sbr.rel (%p150) target = $region28
      $region27: #{tpu_custom_call.1} parent=15 // pred_region
        %s153 = smul.u32 72, %s9
        %p154 = scmp.lt.s32.totalorder %s153, 143
        %s155 = scalar_select %p154, %s153, 143
        %s156 = smul.addr %s155, 8
        %s157 = scalar_lea.vmem %s2, %s156
        %s158 = smul.u32 72, %s9
      $region28: #{tpu_custom_call.1} parent=15 // pred_fallthru
        _
    $region16: #{tpu_custom_call.1} parent=5 // pred_fallthru
      _
    %p159 = scmp.le.s32.totalorder 1, %s9
    %p160 = scmp.lt.s32.totalorder %s9, 3
    %p161 = pnand %p159, %p160
    %p162 = pneg %p161
    // Predicated region
    $region29: #{tpu_custom_call.1} parent=5 // pred_check
      _
    $region30: #{tpu_custom_call.1} parent=5 // pred_check_branch
      %164 = sbr.rel (%p161) target = $region32
    $region31: #{tpu_custom_call.1} parent=5 // pred_region
      %s165 = ssub.s32 %s9, 1
      %s166 = smul.u32 72, %s14
      %p167 = scmp.lt.s32.totalorder %s166, 143
      %s168 = scalar_select %p167, %s166, 143
      %s169 = smul.addr %s168, 8
      %s170 = scalar_lea.vmem %s0, %s169
      %p171 = pneg %p35
      %p172 = pneg %p32
      %s173 = smul.u32 72, %s14
      %p174 = scmp.lt.s32.totalorder %s173, 143
      %s175 = scalar_select %p174, %s173, 143
      %s176 = smul.addr %s175, 8
      %s177 = scalar_lea.vmem %s1, %s176
      %p178 = pneg %p61
      %p179 = pneg %p58
      %s180 = smul.u32 72, %s14
      %p181 = scmp.lt.s32.totalorder %s180, 143
      %s182 = scalar_select %p181, %s180, 143
      %s183 = smul.addr %s182, 8
      %s184 = scalar_lea.vmem %s2, %s183
      %p185 = pneg %p87
      %p186 = pneg %p84
      %p187 = pneg %p113
      %p188 = pneg %p110
      %s189 = smul.u32 72, %s14
      %p190 = scmp.lt.s32.totalorder %s189, 143
      %s191 = scalar_select %p190, %s189, 143
      %s192 = smul.addr %s191, 8
      %s193 = scalar_lea.vmem %s3, %s192
      %s194 = smul.u32 72, %s14
      %p195 = scmp.lt.s32.totalorder %s194, 143
      %s196 = scalar_select %p195, %s194, 143
      %s197 = smul.addr %s196, 8
      %s198 = scalar_lea.vmem %s0, %s197
      %s199 = smul.u32 72, %s14
      %s200 = smul.u32 72, %s14
      %p201 = scmp.lt.s32.totalorder %s200, 143
      %s202 = scalar_select %p201, %s200, 143
      %s203 = smul.addr %s202, 8
      %s204 = scalar_lea.vmem %s1, %s203
      %s205 = smul.u32 72, %s14
      %s206 = smul.u32 72, %s14
      %p207 = scmp.lt.s32.totalorder %s206, 143
      %s208 = scalar_select %p207, %s206, 143
      %s209 = smul.addr %s208, 8
      %s210 = scalar_lea.vmem %s2, %s209
      %s211 = smul.u32 72, %s14
      %s212 = smul.u32 72, %s14
      %p213 = scmp.lt.s32.totalorder %s212, 143
      %s214 = scalar_select %p213, %s212, 143
      %s215 = smul.addr %s214, 8
      %s216 = scalar_lea.vmem %s3, %s215
      %s217 = smul.u32 72, %s14
      %v218 = vld [vmem:[%s198] sm:$0xff]
      %v219 = vld [vmem:[%s198 + $0x8] sm:$0xff]
      %v220 = vld [vmem:[%s198 + $0x10] sm:$0xff]
      %v221 = vld [vmem:[%s198 + $0x18] sm:$0xff]
      %v222 = vld [vmem:[%s198 + $0x20] sm:$0xff]
      %v223 = vld [vmem:[%s198 + $0x28] sm:$0xff]
      %v224 = vld [vmem:[%s198 + $0x30] sm:$0xff]
      %v225 = vld [vmem:[%s198 + $0x38] sm:$0xff]
      %v226 = vld [vmem:[%s198 + $0x40] sm:$0xff]
      %v227 = vld [vmem:[%s198 + $0x48] sm:$0xff]
      %v228 = vld [vmem:[%s198 + $0x50] sm:$0xff]
      %v229 = vld [vmem:[%s198 + $0x58] sm:$0xff]
      %v230 = vld [vmem:[%s198 + $0x60] sm:$0xff]
      %v231 = vld [vmem:[%s198 + $0x68] sm:$0xff]
      %v232 = vld [vmem:[%s198 + $0x70] sm:$0xff]
      %v233 = vld [vmem:[%s198 + $0x78] sm:$0xff]
      %v234 = vld [vmem:[%s198 + $0x80] sm:$0xff]
      %v235 = vld [vmem:[%s198 + $0x88] sm:$0xff]
      %v236 = vld [vmem:[%s198 + $0x90] sm:$0xff]
      %v237 = vld [vmem:[%s198 + $0x98] sm:$0xff]
      %v238 = vld [vmem:[%s198 + $0xa0] sm:$0xff]
      %v239 = vld [vmem:[%s198 + $0xa8] sm:$0xff]
      %v240 = vld [vmem:[%s198 + $0xb0] sm:$0xff]
      %v241 = vld [vmem:[%s198 + $0xb8] sm:$0xff]
      %v242 = vld [vmem:[%s198 + $0xc0] sm:$0xff]
      %v243 = vld [vmem:[%s198 + $0xc8] sm:$0xff]
      %v244 = vld [vmem:[%s198 + $0xd0] sm:$0xff]
      %v245 = vld [vmem:[%s198 + $0xd8] sm:$0xff]
      %v246 = vld [vmem:[%s198 + $0xe0] sm:$0xff]
      %v247 = vld [vmem:[%s198 + $0xe8] sm:$0xff]
      %v248 = vld [vmem:[%s198 + $0xf0] sm:$0xff]
      %v249 = vld [vmem:[%s198 + $0xf8] sm:$0xff]
      %v250 = vld [vmem:[%s198 + $0x100] sm:$0xff]
      %v251 = vld [vmem:[%s198 + $0x108] sm:$0xff]
      %v252 = vld [vmem:[%s198 + $0x110] sm:$0xff]
      %v253 = vld [vmem:[%s198 + $0x118] sm:$0xff]
      %v254 = vld [vmem:[%s198 + $0x120] sm:$0xff]
      %v255 = vld [vmem:[%s198 + $0x128] sm:$0xff]
      %v256 = vld [vmem:[%s198 + $0x130] sm:$0xff]
      %v257 = vld [vmem:[%s198 + $0x138] sm:$0xff]
      %v258 = vld [vmem:[%s198 + $0x140] sm:$0xff]
      %v259 = vld [vmem:[%s198 + $0x148] sm:$0xff]
      %v260 = vld [vmem:[%s198 + $0x150] sm:$0xff]
      %v261 = vld [vmem:[%s198 + $0x158] sm:$0xff]
      %v262 = vld [vmem:[%s198 + $0x160] sm:$0xff]
      %v263 = vld [vmem:[%s198 + $0x168] sm:$0xff]
      %v264 = vld [vmem:[%s198 + $0x170] sm:$0xff]
      %v265 = vld [vmem:[%s198 + $0x178] sm:$0xff]
      %v266 = vld [vmem:[%s198 + $0x180] sm:$0xff]
      %v267 = vld [vmem:[%s198 + $0x188] sm:$0xff]
      %v268 = vld [vmem:[%s198 + $0x190] sm:$0xff]
      %v269 = vld [vmem:[%s198 + $0x198] sm:$0xff]
      %v270 = vld [vmem:[%s198 + $0x1a0] sm:$0xff]
      %v271 = vld [vmem:[%s198 + $0x1a8] sm:$0xff]
      %v272 = vld [vmem:[%s198 + $0x1b0] sm:$0xff]
      %v273 = vld [vmem:[%s198 + $0x1b8] sm:$0xff]
      %v274 = vld [vmem:[%s198 + $0x1c0] sm:$0xff]
      %v275 = vld [vmem:[%s198 + $0x1c8] sm:$0xff]
      %v276 = vld [vmem:[%s198 + $0x1d0] sm:$0xff]
      %v277 = vld [vmem:[%s198 + $0x1d8] sm:$0xff]
      %v278 = vld [vmem:[%s198 + $0x1e0] sm:$0xff]
      %v279 = vld [vmem:[%s198 + $0x1e8] sm:$0xff]
      %v280 = vld [vmem:[%s198 + $0x1f0] sm:$0xff]
      %v281 = vld [vmem:[%s198 + $0x1f8] sm:$0xff]
      %v282 = vld [vmem:[%s198 + $0x200] sm:$0xff]
      %v283 = vld [vmem:[%s198 + $0x208] sm:$0xff]
      %v284 = vld [vmem:[%s198 + $0x210] sm:$0xff]
      %v285 = vld [vmem:[%s198 + $0x218] sm:$0xff]
      %v286 = vld [vmem:[%s198 + $0x220] sm:$0xff]
      %v287 = vld [vmem:[%s198 + $0x228] sm:$0xff]
      %v288 = vld [vmem:[%s198 + $0x230] sm:$0xff]
      %v289 = vld [vmem:[%s198 + $0x238] sm:$0xff]
      %vm290 = vcmask 400384
      %v291 = vsel %vm290, %v218, 0.0
      %292 = vadd.xlane.f32.xlu0 %v291
      %v293 = vpop.xlane.xlu0 %292
      %v294 = vsel %vm290, %v219, 0.0
      %295 = vadd.xlane.f32.xlu0 %v294
      %v296 = vpop.xlane.xlu0 %295
      %v297 = vsel %vm290, %v220, 0.0
      %298 = vadd.xlane.f32.xlu0 %v297
      %v299 = vpop.xlane.xlu0 %298
      %v300 = vsel %vm290, %v221, 0.0
      %301 = vadd.xlane.f32.xlu0 %v300
      %v302 = vpop.xlane.xlu0 %301
      %v303 = vsel %vm290, %v222, 0.0
      %304 = vadd.xlane.f32.xlu0 %v303
      %v305 = vpop.xlane.xlu0 %304
      %v306 = vsel %vm290, %v223, 0.0
      %307 = vadd.xlane.f32.xlu0 %v306
      %v308 = vpop.xlane.xlu0 %307
      %v309 = vsel %vm290, %v224, 0.0
      %310 = vadd.xlane.f32.xlu0 %v309
      %v311 = vpop.xlane.xlu0 %310
      %v312 = vsel %vm290, %v225, 0.0
      %313 = vadd.xlane.f32.xlu0 %v312
      %v314 = vpop.xlane.xlu0 %313
      %v315 = vsel %vm290, %v226, 0.0
      %316 = vadd.xlane.f32.xlu0 %v315
      %v317 = vpop.xlane.xlu0 %316
      %v318 = vsel %vm290, %v227, 0.0
      %319 = vadd.xlane.f32.xlu0 %v318
      %v320 = vpop.xlane.xlu0 %319
      %v321 = vsel %vm290, %v228, 0.0
      %322 = vadd.xlane.f32.xlu0 %v321
      %v323 = vpop.xlane.xlu0 %322
      %v324 = vsel %vm290, %v229, 0.0
      %325 = vadd.xlane.f32.xlu0 %v324
      %v326 = vpop.xlane.xlu0 %325
      %v327 = vsel %vm290, %v230, 0.0
      %328 = vadd.xlane.f32.xlu0 %v327
      %v329 = vpop.xlane.xlu0 %328
      %v330 = vsel %vm290, %v231, 0.0
      %331 = vadd.xlane.f32.xlu0 %v330
      %v332 = vpop.xlane.xlu0 %331
      %v333 = vsel %vm290, %v232, 0.0
      %334 = vadd.xlane.f32.xlu0 %v333
      %v335 = vpop.xlane.xlu0 %334
      %v336 = vsel %vm290, %v233, 0.0
      %337 = vadd.xlane.f32.xlu0 %v336
      %v338 = vpop.xlane.xlu0 %337
      %v339 = vsel %vm290, %v234, 0.0
      %340 = vadd.xlane.f32.xlu0 %v339
      %v341 = vpop.xlane.xlu0 %340
      %v342 = vsel %vm290, %v235, 0.0
      %343 = vadd.xlane.f32.xlu0 %v342
      %v344 = vpop.xlane.xlu0 %343
      %v345 = vsel %vm290, %v236, 0.0
      %346 = vadd.xlane.f32.xlu0 %v345
      %v347 = vpop.xlane.xlu0 %346
      %v348 = vsel %vm290, %v237, 0.0
      %349 = vadd.xlane.f32.xlu0 %v348
      %v350 = vpop.xlane.xlu0 %349
      %v351 = vsel %vm290, %v238, 0.0
      %352 = vadd.xlane.f32.xlu0 %v351
      %v353 = vpop.xlane.xlu0 %352
      %v354 = vsel %vm290, %v239, 0.0
      %355 = vadd.xlane.f32.xlu0 %v354
      %v356 = vpop.xlane.xlu0 %355
      %v357 = vsel %vm290, %v240, 0.0
      %358 = vadd.xlane.f32.xlu0 %v357
      %v359 = vpop.xlane.xlu0 %358
      %v360 = vsel %vm290, %v241, 0.0
      %361 = vadd.xlane.f32.xlu0 %v360
      %v362 = vpop.xlane.xlu0 %361
      %v363 = vsel %vm290, %v242, 0.0
      %364 = vadd.xlane.f32.xlu0 %v363
      %v365 = vpop.xlane.xlu0 %364
      %v366 = vsel %vm290, %v243, 0.0
      %367 = vadd.xlane.f32.xlu0 %v366
      %v368 = vpop.xlane.xlu0 %367
      %v369 = vsel %vm290, %v244, 0.0
      %370 = vadd.xlane.f32.xlu0 %v369
      %v371 = vpop.xlane.xlu0 %370
      %v372 = vsel %vm290, %v245, 0.0
      %373 = vadd.xlane.f32.xlu0 %v372
      %v374 = vpop.xlane.xlu0 %373
      %v375 = vsel %vm290, %v246, 0.0
      %376 = vadd.xlane.f32.xlu0 %v375
      %v377 = vpop.xlane.xlu0 %376
      %v378 = vsel %vm290, %v247, 0.0
      %379 = vadd.xlane.f32.xlu0 %v378
      %v380 = vpop.xlane.xlu0 %379
      %v381 = vsel %vm290, %v248, 0.0
      %382 = vadd.xlane.f32.xlu0 %v381
      %v383 = vpop.xlane.xlu0 %382
      %v384 = vsel %vm290, %v249, 0.0
      %385 = vadd.xlane.f32.xlu0 %v384
      %v386 = vpop.xlane.xlu0 %385
      %v387 = vsel %vm290, %v250, 0.0
      %388 = vadd.xlane.f32.xlu0 %v387
      %v389 = vpop.xlane.xlu0 %388
      %v390 = vsel %vm290, %v251, 0.0
      %391 = vadd.xlane.f32.xlu0 %v390
      %v392 = vpop.xlane.xlu0 %391
      %v393 = vsel %vm290, %v252, 0.0
      %394 = vadd.xlane.f32.xlu0 %v393
      %v395 = vpop.xlane.xlu0 %394
      %v396 = vsel %vm290, %v253, 0.0
      %397 = vadd.xlane.f32.xlu0 %v396
      %v398 = vpop.xlane.xlu0 %397
      %v399 = vsel %vm290, %v254, 0.0
      %400 = vadd.xlane.f32.xlu0 %v399
      %v401 = vpop.xlane.xlu0 %400
      %v402 = vsel %vm290, %v255, 0.0
      %403 = vadd.xlane.f32.xlu0 %v402
      %v404 = vpop.xlane.xlu0 %403
      %v405 = vsel %vm290, %v256, 0.0
      %406 = vadd.xlane.f32.xlu0 %v405
      %v407 = vpop.xlane.xlu0 %406
      %v408 = vsel %vm290, %v257, 0.0
      %409 = vadd.xlane.f32.xlu0 %v408
      %v410 = vpop.xlane.xlu0 %409
      %v411 = vsel %vm290, %v258, 0.0
      %412 = vadd.xlane.f32.xlu0 %v411
      %v413 = vpop.xlane.xlu0 %412
      %v414 = vsel %vm290, %v259, 0.0
      %415 = vadd.xlane.f32.xlu0 %v414
      %v416 = vpop.xlane.xlu0 %415
      %v417 = vsel %vm290, %v260, 0.0
      %418 = vadd.xlane.f32.xlu0 %v417
      %v419 = vpop.xlane.xlu0 %418
      %v420 = vsel %vm290, %v261, 0.0
      %421 = vadd.xlane.f32.xlu0 %v420
      %v422 = vpop.xlane.xlu0 %421
      %v423 = vsel %vm290, %v262, 0.0
      %424 = vadd.xlane.f32.xlu0 %v423
      %v425 = vpop.xlane.xlu0 %424
      %v426 = vsel %vm290, %v263, 0.0
      %427 = vadd.xlane.f32.xlu0 %v426
      %v428 = vpop.xlane.xlu0 %427
      %v429 = vsel %vm290, %v264, 0.0
      %430 = vadd.xlane.f32.xlu0 %v429
      %v431 = vpop.xlane.xlu0 %430
      %v432 = vsel %vm290, %v265, 0.0
      %433 = vadd.xlane.f32.xlu0 %v432
      %v434 = vpop.xlane.xlu0 %433
      %v435 = vsel %vm290, %v266, 0.0
      %436 = vadd.xlane.f32.xlu0 %v435
      %v437 = vpop.xlane.xlu0 %436
      %v438 = vsel %vm290, %v267, 0.0
      %439 = vadd.xlane.f32.xlu0 %v438
      %v440 = vpop.xlane.xlu0 %439
      %v441 = vsel %vm290, %v268, 0.0
      %442 = vadd.xlane.f32.xlu0 %v441
      %v443 = vpop.xlane.xlu0 %442
      %v444 = vsel %vm290, %v269, 0.0
      %445 = vadd.xlane.f32.xlu0 %v444
      %v446 = vpop.xlane.xlu0 %445
      %v447 = vsel %vm290, %v270, 0.0
      %448 = vadd.xlane.f32.xlu0 %v447
      %v449 = vpop.xlane.xlu0 %448
      %v450 = vsel %vm290, %v271, 0.0
      %451 = vadd.xlane.f32.xlu0 %v450
      %v452 = vpop.xlane.xlu0 %451
      %v453 = vsel %vm290, %v272, 0.0
      %454 = vadd.xlane.f32.xlu0 %v453
      %v455 = vpop.xlane.xlu0 %454
      %v456 = vsel %vm290, %v273, 0.0
      %457 = vadd.xlane.f32.xlu0 %v456
      %v458 = vpop.xlane.xlu0 %457
      %v459 = vsel %vm290, %v274, 0.0
      %460 = vadd.xlane.f32.xlu0 %v459
      %v461 = vpop.xlane.xlu0 %460
      %v462 = vsel %vm290, %v275, 0.0
      %463 = vadd.xlane.f32.xlu0 %v462
      %v464 = vpop.xlane.xlu0 %463
      %v465 = vsel %vm290, %v276, 0.0
      %466 = vadd.xlane.f32.xlu0 %v465
      %v467 = vpop.xlane.xlu0 %466
      %v468 = vsel %vm290, %v277, 0.0
      %469 = vadd.xlane.f32.xlu0 %v468
      %v470 = vpop.xlane.xlu0 %469
      %v471 = vsel %vm290, %v278, 0.0
      %472 = vadd.xlane.f32.xlu0 %v471
      %v473 = vpop.xlane.xlu0 %472
      %v474 = vsel %vm290, %v279, 0.0
      %475 = vadd.xlane.f32.xlu0 %v474
      %v476 = vpop.xlane.xlu0 %475
      %v477 = vsel %vm290, %v280, 0.0
      %478 = vadd.xlane.f32.xlu0 %v477
      %v479 = vpop.xlane.xlu0 %478
      %v480 = vsel %vm290, %v281, 0.0
      %481 = vadd.xlane.f32.xlu0 %v480
      %v482 = vpop.xlane.xlu0 %481
      %v483 = vsel %vm290, %v282, 0.0
      %484 = vadd.xlane.f32.xlu0 %v483
      %v485 = vpop.xlane.xlu0 %484
      %v486 = vsel %vm290, %v283, 0.0
      %487 = vadd.xlane.f32.xlu0 %v486
      %v488 = vpop.xlane.xlu0 %487
      %v489 = vsel %vm290, %v284, 0.0
      %490 = vadd.xlane.f32.xlu0 %v489
      %v491 = vpop.xlane.xlu0 %490
      %v492 = vsel %vm290, %v285, 0.0
      %493 = vadd.xlane.f32.xlu0 %v492
      %v494 = vpop.xlane.xlu0 %493
      %v495 = vsel %vm290, %v286, 0.0
      %496 = vadd.xlane.f32.xlu0 %v495
      %v497 = vpop.xlane.xlu0 %496
      %v498 = vsel %vm290, %v287, 0.0
      %499 = vadd.xlane.f32.xlu0 %v498
      %v500 = vpop.xlane.xlu0 %499
      %v501 = vsel %vm290, %v288, 0.0
      %502 = vadd.xlane.f32.xlu0 %v501
      %v503 = vpop.xlane.xlu0 %502
      %v504 = vsel %vm290, %v289, 0.0
      %505 = vadd.xlane.f32.xlu0 %v504
      %v506 = vpop.xlane.xlu0 %505
      %v507 = vmul.f32 %v218, %v218
      %v508 = vmul.f32 %v219, %v219
      %v509 = vmul.f32 %v220, %v220
      %v510 = vmul.f32 %v221, %v221
      %v511 = vmul.f32 %v222, %v222
      %v512 = vmul.f32 %v223, %v223
      %v513 = vmul.f32 %v224, %v224
      %v514 = vmul.f32 %v225, %v225
      %v515 = vmul.f32 %v226, %v226
      %v516 = vmul.f32 %v227, %v227
      %v517 = vmul.f32 %v228, %v228
      %v518 = vmul.f32 %v229, %v229
      %v519 = vmul.f32 %v230, %v230
      %v520 = vmul.f32 %v231, %v231
      %v521 = vmul.f32 %v232, %v232
      %v522 = vmul.f32 %v233, %v233
      %v523 = vmul.f32 %v234, %v234
      %v524 = vmul.f32 %v235, %v235
      %v525 = vmul.f32 %v236, %v236
      %v526 = vmul.f32 %v237, %v237
      %v527 = vmul.f32 %v238, %v238
      %v528 = vmul.f32 %v239, %v239
      %v529 = vmul.f32 %v240, %v240
      %v530 = vmul.f32 %v241, %v241
      %v531 = vmul.f32 %v242, %v242
      %v532 = vmul.f32 %v243, %v243
      %v533 = vmul.f32 %v244, %v244
      %v534 = vmul.f32 %v245, %v245
      %v535 = vmul.f32 %v246, %v246
      %v536 = vmul.f32 %v247, %v247
      %v537 = vmul.f32 %v248, %v248
      %v538 = vmul.f32 %v249, %v249
      %v539 = vmul.f32 %v250, %v250
      %v540 = vmul.f32 %v251, %v251
      %v541 = vmul.f32 %v252, %v252
      %v542 = vmul.f32 %v253, %v253
      %v543 = vmul.f32 %v254, %v254
      %v544 = vmul.f32 %v255, %v255
      %v545 = vmul.f32 %v256, %v256
      %v546 = vmul.f32 %v257, %v257
      %v547 = vmul.f32 %v258, %v258
      %v548 = vmul.f32 %v259, %v259
      %v549 = vmul.f32 %v260, %v260
      %v550 = vmul.f32 %v261, %v261
      %v551 = vmul.f32 %v262, %v262
      %v552 = vmul.f32 %v263, %v263
      %v553 = vmul.f32 %v264, %v264
      %v554 = vmul.f32 %v265, %v265
      %v555 = vmul.f32 %v266, %v266
      %v556 = vmul.f32 %v267, %v267
      %v557 = vmul.f32 %v268, %v268
      %v558 = vmul.f32 %v269, %v269
      %v559 = vmul.f32 %v270, %v270
      %v560 = vmul.f32 %v271, %v271
      %v561 = vmul.f32 %v272, %v272
      %v562 = vmul.f32 %v273, %v273
      %v563 = vmul.f32 %v274, %v274
      %v564 = vmul.f32 %v275, %v275
      %v565 = vmul.f32 %v276, %v276
      %v566 = vmul.f32 %v277, %v277
      %v567 = vmul.f32 %v278, %v278
      %v568 = vmul.f32 %v279, %v279
      %v569 = vmul.f32 %v280, %v280
      %v570 = vmul.f32 %v281, %v281
      %v571 = vmul.f32 %v282, %v282
      %v572 = vmul.f32 %v283, %v283
      %v573 = vmul.f32 %v284, %v284
      %v574 = vmul.f32 %v285, %v285
      %v575 = vmul.f32 %v286, %v286
      %v576 = vmul.f32 %v287, %v287
      %v577 = vmul.f32 %v288, %v288
      %v578 = vmul.f32 %v289, %v289
      %v579 = vsel %vm290, %v507, 0.0
      %580 = vadd.xlane.f32.xlu0 %v579
      %v581 = vpop.xlane.xlu0 %580
      %v582 = vsel %vm290, %v508, 0.0
      %583 = vadd.xlane.f32.xlu0 %v582
      %v584 = vpop.xlane.xlu0 %583
      %v585 = vsel %vm290, %v509, 0.0
      %586 = vadd.xlane.f32.xlu0 %v585
      %v587 = vpop.xlane.xlu0 %586
      %v588 = vsel %vm290, %v510, 0.0
      %589 = vadd.xlane.f32.xlu0 %v588
      %v590 = vpop.xlane.xlu0 %589
      %v591 = vsel %vm290, %v511, 0.0
      %592 = vadd.xlane.f32.xlu0 %v591
      %v593 = vpop.xlane.xlu0 %592
      %v594 = vsel %vm290, %v512, 0.0
      %595 = vadd.xlane.f32.xlu0 %v594
      %v596 = vpop.xlane.xlu0 %595
      %v597 = vsel %vm290, %v513, 0.0
      %598 = vadd.xlane.f32.xlu0 %v597
      %v599 = vpop.xlane.xlu0 %598
      %v600 = vsel %vm290, %v514, 0.0
      %601 = vadd.xlane.f32.xlu0 %v600
      %v602 = vpop.xlane.xlu0 %601
      %v603 = vsel %vm290, %v515, 0.0
      %604 = vadd.xlane.f32.xlu0 %v603
      %v605 = vpop.xlane.xlu0 %604
      %v606 = vsel %vm290, %v516, 0.0
      %607 = vadd.xlane.f32.xlu0 %v606
      %v608 = vpop.xlane.xlu0 %607
      %v609 = vsel %vm290, %v517, 0.0
      %610 = vadd.xlane.f32.xlu0 %v609
      %v611 = vpop.xlane.xlu0 %610
      %v612 = vsel %vm290, %v518, 0.0
      %613 = vadd.xlane.f32.xlu0 %v612
      %v614 = vpop.xlane.xlu0 %613
      %v615 = vsel %vm290, %v519, 0.0
      %616 = vadd.xlane.f32.xlu0 %v615
      %v617 = vpop.xlane.xlu0 %616
      %v618 = vsel %vm290, %v520, 0.0
      %619 = vadd.xlane.f32.xlu0 %v618
      %v620 = vpop.xlane.xlu0 %619
      %v621 = vsel %vm290, %v521, 0.0
      %622 = vadd.xlane.f32.xlu0 %v621
      %v623 = vpop.xlane.xlu0 %622
      %v624 = vsel %vm290, %v522, 0.0
      %625 = vadd.xlane.f32.xlu0 %v624
      %v626 = vpop.xlane.xlu0 %625
      %v627 = vsel %vm290, %v523, 0.0
      %628 = vadd.xlane.f32.xlu0 %v627
      %v629 = vpop.xlane.xlu0 %628
      %v630 = vsel %vm290, %v524, 0.0
      %631 = vadd.xlane.f32.xlu0 %v630
      %v632 = vpop.xlane.xlu0 %631
      %v633 = vsel %vm290, %v525, 0.0
      %634 = vadd.xlane.f32.xlu0 %v633
      %v635 = vpop.xlane.xlu0 %634
      %v636 = vsel %vm290, %v526, 0.0
      %637 = vadd.xlane.f32.xlu0 %v636
      %v638 = vpop.xlane.xlu0 %637
      %v639 = vsel %vm290, %v527, 0.0
      %640 = vadd.xlane.f32.xlu0 %v639
      %v641 = vpop.xlane.xlu0 %640
      %v642 = vsel %vm290, %v528, 0.0
      %643 = vadd.xlane.f32.xlu0 %v642
      %v644 = vpop.xlane.xlu0 %643
      %v645 = vsel %vm290, %v529, 0.0
      %646 = vadd.xlane.f32.xlu0 %v645
      %v647 = vpop.xlane.xlu0 %646
      %v648 = vsel %vm290, %v530, 0.0
      %649 = vadd.xlane.f32.xlu0 %v648
      %v650 = vpop.xlane.xlu0 %649
      %v651 = vsel %vm290, %v531, 0.0
      %652 = vadd.xlane.f32.xlu0 %v651
      %v653 = vpop.xlane.xlu0 %652
      %v654 = vsel %vm290, %v532, 0.0
      %655 = vadd.xlane.f32.xlu0 %v654
      %v656 = vpop.xlane.xlu0 %655
      %v657 = vsel %vm290, %v533, 0.0
      %658 = vadd.xlane.f32.xlu0 %v657
      %v659 = vpop.xlane.xlu0 %658
      %v660 = vsel %vm290, %v534, 0.0
      %661 = vadd.xlane.f32.xlu0 %v660
      %v662 = vpop.xlane.xlu0 %661
      %v663 = vsel %vm290, %v535, 0.0
      %664 = vadd.xlane.f32.xlu0 %v663
      %v665 = vpop.xlane.xlu0 %664
      %v666 = vsel %vm290, %v536, 0.0
      %667 = vadd.xlane.f32.xlu0 %v666
      %v668 = vpop.xlane.xlu0 %667
      %v669 = vsel %vm290, %v537, 0.0
      %670 = vadd.xlane.f32.xlu0 %v669
      %v671 = vpop.xlane.xlu0 %670
      %v672 = vsel %vm290, %v538, 0.0
      %673 = vadd.xlane.f32.xlu0 %v672
      %v674 = vpop.xlane.xlu0 %673
      %v675 = vsel %vm290, %v539, 0.0
      %676 = vadd.xlane.f32.xlu0 %v675
      %v677 = vpop.xlane.xlu0 %676
      %v678 = vsel %vm290, %v540, 0.0
      %679 = vadd.xlane.f32.xlu0 %v678
      %v680 = vpop.xlane.xlu0 %679
      %v681 = vsel %vm290, %v541, 0.0
      %682 = vadd.xlane.f32.xlu0 %v681
      %v683 = vpop.xlane.xlu0 %682
      %v684 = vsel %vm290, %v542, 0.0
      %685 = vadd.xlane.f32.xlu0 %v684
      %v686 = vpop.xlane.xlu0 %685
      %v687 = vsel %vm290, %v543, 0.0
      %688 = vadd.xlane.f32.xlu0 %v687
      %v689 = vpop.xlane.xlu0 %688
      %v690 = vsel %vm290, %v544, 0.0
      %691 = vadd.xlane.f32.xlu0 %v690
      %v692 = vpop.xlane.xlu0 %691
      %v693 = vsel %vm290, %v545, 0.0
      %694 = vadd.xlane.f32.xlu0 %v693
      %v695 = vpop.xlane.xlu0 %694
      %v696 = vsel %vm290, %v546, 0.0
      %697 = vadd.xlane.f32.xlu0 %v696
      %v698 = vpop.xlane.xlu0 %697
      %v699 = vsel %vm290, %v547, 0.0
      %700 = vadd.xlane.f32.xlu0 %v699
      %v701 = vpop.xlane.xlu0 %700
      %v702 = vsel %vm290, %v548, 0.0
      %703 = vadd.xlane.f32.xlu0 %v702
      %v704 = vpop.xlane.xlu0 %703
      %v705 = vsel %vm290, %v549, 0.0
      %706 = vadd.xlane.f32.xlu0 %v705
      %v707 = vpop.xlane.xlu0 %706
      %v708 = vsel %vm290, %v550, 0.0
      %709 = vadd.xlane.f32.xlu0 %v708
      %v710 = vpop.xlane.xlu0 %709
      %v711 = vsel %vm290, %v551, 0.0
      %712 = vadd.xlane.f32.xlu0 %v711
      %v713 = vpop.xlane.xlu0 %712
      %v714 = vsel %vm290, %v552, 0.0
      %715 = vadd.xlane.f32.xlu0 %v714
      %v716 = vpop.xlane.xlu0 %715
      %v717 = vsel %vm290, %v553, 0.0
      %718 = vadd.xlane.f32.xlu0 %v717
      %v719 = vpop.xlane.xlu0 %718
      %v720 = vsel %vm290, %v554, 0.0
      %721 = vadd.xlane.f32.xlu0 %v720
      %v722 = vpop.xlane.xlu0 %721
      %v723 = vsel %vm290, %v555, 0.0
      %724 = vadd.xlane.f32.xlu0 %v723
      %v725 = vpop.xlane.xlu0 %724
      %v726 = vsel %vm290, %v556, 0.0
      %727 = vadd.xlane.f32.xlu0 %v726
      %v728 = vpop.xlane.xlu0 %727
      %v729 = vsel %vm290, %v557, 0.0
      %730 = vadd.xlane.f32.xlu0 %v729
      %v731 = vpop.xlane.xlu0 %730
      %v732 = vsel %vm290, %v558, 0.0
      %733 = vadd.xlane.f32.xlu0 %v732
      %v734 = vpop.xlane.xlu0 %733
      %v735 = vsel %vm290, %v559, 0.0
      %736 = vadd.xlane.f32.xlu0 %v735
      %v737 = vpop.xlane.xlu0 %736
      %v738 = vsel %vm290, %v560, 0.0
      %739 = vadd.xlane.f32.xlu0 %v738
      %v740 = vpop.xlane.xlu0 %739
      %v741 = vsel %vm290, %v561, 0.0
      %742 = vadd.xlane.f32.xlu0 %v741
      %v743 = vpop.xlane.xlu0 %742
      %v744 = vsel %vm290, %v562, 0.0
      %745 = vadd.xlane.f32.xlu0 %v744
      %v746 = vpop.xlane.xlu0 %745
      %v747 = vsel %vm290, %v563, 0.0
      %748 = vadd.xlane.f32.xlu0 %v747
      %v749 = vpop.xlane.xlu0 %748
      %v750 = vsel %vm290, %v564, 0.0
      %751 = vadd.xlane.f32.xlu0 %v750
      %v752 = vpop.xlane.xlu0 %751
      %v753 = vsel %vm290, %v565, 0.0
      %754 = vadd.xlane.f32.xlu0 %v753
      %v755 = vpop.xlane.xlu0 %754
      %v756 = vsel %vm290, %v566, 0.0
      %757 = vadd.xlane.f32.xlu0 %v756
      %v758 = vpop.xlane.xlu0 %757
      %v759 = vsel %vm290, %v567, 0.0
      %760 = vadd.xlane.f32.xlu0 %v759
      %v761 = vpop.xlane.xlu0 %760
      %v762 = vsel %vm290, %v568, 0.0
      %763 = vadd.xlane.f32.xlu0 %v762
      %v764 = vpop.xlane.xlu0 %763
      %v765 = vsel %vm290, %v569, 0.0
      %766 = vadd.xlane.f32.xlu0 %v765
      %v767 = vpop.xlane.xlu0 %766
      %v768 = vsel %vm290, %v570, 0.0
      %769 = vadd.xlane.f32.xlu0 %v768
      %v770 = vpop.xlane.xlu0 %769
      %v771 = vsel %vm290, %v571, 0.0
      %772 = vadd.xlane.f32.xlu0 %v771
      %v773 = vpop.xlane.xlu0 %772
      %v774 = vsel %vm290, %v572, 0.0
      %775 = vadd.xlane.f32.xlu0 %v774
      %v776 = vpop.xlane.xlu0 %775
      %v777 = vsel %vm290, %v573, 0.0
      %778 = vadd.xlane.f32.xlu0 %v777
      %v779 = vpop.xlane.xlu0 %778
      %v780 = vsel %vm290, %v574, 0.0
      %781 = vadd.xlane.f32.xlu0 %v780
      %v782 = vpop.xlane.xlu0 %781
      %v783 = vsel %vm290, %v575, 0.0
      %784 = vadd.xlane.f32.xlu0 %v783
      %v785 = vpop.xlane.xlu0 %784
      %v786 = vsel %vm290, %v576, 0.0
      %787 = vadd.xlane.f32.xlu0 %v786
      %v788 = vpop.xlane.xlu0 %787
      %v789 = vsel %vm290, %v577, 0.0
      %790 = vadd.xlane.f32.xlu0 %v789
      %v791 = vpop.xlane.xlu0 %790
      %v792 = vsel %vm290, %v578, 0.0
      %793 = vadd.xlane.f32.xlu0 %v792
      %v794 = vpop.xlane.xlu0 %793
      %v795 = vmul.f32 %v293, 0.020408163
      %v796 = vmul.f32 %v296, 0.020408163
      %v797 = vmul.f32 %v299, 0.020408163
      %v798 = vmul.f32 %v302, 0.020408163
      %v799 = vmul.f32 %v305, 0.020408163
      %v800 = vmul.f32 %v308, 0.020408163
      %v801 = vmul.f32 %v311, 0.020408163
      %v802 = vmul.f32 %v314, 0.020408163
      %v803 = vmul.f32 %v317, 0.020408163
      %v804 = vmul.f32 %v320, 0.020408163
      %v805 = vmul.f32 %v323, 0.020408163
      %v806 = vmul.f32 %v326, 0.020408163
      %v807 = vmul.f32 %v329, 0.020408163
      %v808 = vmul.f32 %v332, 0.020408163
      %v809 = vmul.f32 %v335, 0.020408163
      %v810 = vmul.f32 %v338, 0.020408163
      %v811 = vmul.f32 %v341, 0.020408163
      %v812 = vmul.f32 %v344, 0.020408163
      %v813 = vmul.f32 %v347, 0.020408163
      %v814 = vmul.f32 %v350, 0.020408163
      %v815 = vmul.f32 %v353, 0.020408163
      %v816 = vmul.f32 %v356, 0.020408163
      %v817 = vmul.f32 %v359, 0.020408163
      %v818 = vmul.f32 %v362, 0.020408163
      %v819 = vmul.f32 %v365, 0.020408163
      %v820 = vmul.f32 %v368, 0.020408163
      %v821 = vmul.f32 %v371, 0.020408163
      %v822 = vmul.f32 %v374, 0.020408163
      %v823 = vmul.f32 %v377, 0.020408163
      %v824 = vmul.f32 %v380, 0.020408163
      %v825 = vmul.f32 %v383, 0.020408163
      %v826 = vmul.f32 %v386, 0.020408163
      %v827 = vmul.f32 %v389, 0.020408163
      %v828 = vmul.f32 %v392, 0.020408163
      %v829 = vmul.f32 %v395, 0.020408163
      %v830 = vmul.f32 %v398, 0.020408163
      %v831 = vmul.f32 %v401, 0.020408163
      %v832 = vmul.f32 %v404, 0.020408163
      %v833 = vmul.f32 %v407, 0.020408163
      %v834 = vmul.f32 %v410, 0.020408163
      %v835 = vmul.f32 %v413, 0.020408163
      %v836 = vmul.f32 %v416, 0.020408163
      %v837 = vmul.f32 %v419, 0.020408163
      %v838 = vmul.f32 %v422, 0.020408163
      %v839 = vmul.f32 %v425, 0.020408163
      %v840 = vmul.f32 %v428, 0.020408163
      %v841 = vmul.f32 %v431, 0.020408163
      %v842 = vmul.f32 %v434, 0.020408163
      %v843 = vmul.f32 %v437, 0.020408163
      %v844 = vmul.f32 %v440, 0.020408163
      %v845 = vmul.f32 %v443, 0.020408163
      %v846 = vmul.f32 %v446, 0.020408163
      %v847 = vmul.f32 %v449, 0.020408163
      %v848 = vmul.f32 %v452, 0.020408163
      %v849 = vmul.f32 %v455, 0.020408163
      %v850 = vmul.f32 %v458, 0.020408163
      %v851 = vmul.f32 %v461, 0.020408163
      %v852 = vmul.f32 %v464, 0.020408163
      %v853 = vmul.f32 %v467, 0.020408163
      %v854 = vmul.f32 %v470, 0.020408163
      %v855 = vmul.f32 %v473, 0.020408163
      %v856 = vmul.f32 %v476, 0.020408163
      %v857 = vmul.f32 %v479, 0.020408163
      %v858 = vmul.f32 %v482, 0.020408163
      %v859 = vmul.f32 %v485, 0.020408163
      %v860 = vmul.f32 %v488, 0.020408163
      %v861 = vmul.f32 %v491, 0.020408163
      %v862 = vmul.f32 %v494, 0.020408163
      %v863 = vmul.f32 %v497, 0.020408163
      %v864 = vmul.f32 %v500, 0.020408163
      %v865 = vmul.f32 %v503, 0.020408163
      %v866 = vmul.f32 %v506, 0.020408163
      %v867 = vmul.f32 %v581, 0.020408163
      %v868 = vmul.f32 %v584, 0.020408163
      %v869 = vmul.f32 %v587, 0.020408163
      %v870 = vmul.f32 %v590, 0.020408163
      %v871 = vmul.f32 %v593, 0.020408163
      %v872 = vmul.f32 %v596, 0.020408163
      %v873 = vmul.f32 %v599, 0.020408163
      %v874 = vmul.f32 %v602, 0.020408163
      %v875 = vmul.f32 %v605, 0.020408163
      %v876 = vmul.f32 %v608, 0.020408163
      %v877 = vmul.f32 %v611, 0.020408163
      %v878 = vmul.f32 %v614, 0.020408163
      %v879 = vmul.f32 %v617, 0.020408163
      %v880 = vmul.f32 %v620, 0.020408163
      %v881 = vmul.f32 %v623, 0.020408163
      %v882 = vmul.f32 %v626, 0.020408163
      %v883 = vmul.f32 %v629, 0.020408163
      %v884 = vmul.f32 %v632, 0.020408163
      %v885 = vmul.f32 %v635, 0.020408163
      %v886 = vmul.f32 %v638, 0.020408163
      %v887 = vmul.f32 %v641, 0.020408163
      %v888 = vmul.f32 %v644, 0.020408163
      %v889 = vmul.f32 %v647, 0.020408163
      %v890 = vmul.f32 %v650, 0.020408163
      %v891 = vmul.f32 %v653, 0.020408163
      %v892 = vmul.f32 %v656, 0.020408163
      %v893 = vmul.f32 %v659, 0.020408163
      %v894 = vmul.f32 %v662, 0.020408163
      %v895 = vmul.f32 %v665, 0.020408163
      %v896 = vmul.f32 %v668, 0.020408163
      %v897 = vmul.f32 %v671, 0.020408163
      %v898 = vmul.f32 %v674, 0.020408163
      %v899 = vmul.f32 %v677, 0.020408163
      %v900 = vmul.f32 %v680, 0.020408163
      %v901 = vmul.f32 %v683, 0.020408163
      %v902 = vmul.f32 %v686, 0.020408163
      %v903 = vmul.f32 %v689, 0.020408163
      %v904 = vmul.f32 %v692, 0.020408163
      %v905 = vmul.f32 %v695, 0.020408163
      %v906 = vmul.f32 %v698, 0.020408163
      %v907 = vmul.f32 %v701, 0.020408163
      %v908 = vmul.f32 %v704, 0.020408163
      %v909 = vmul.f32 %v707, 0.020408163
      %v910 = vmul.f32 %v710, 0.020408163
      %v911 = vmul.f32 %v713, 0.020408163
      %v912 = vmul.f32 %v716, 0.020408163
      %v913 = vmul.f32 %v719, 0.020408163
      %v914 = vmul.f32 %v722, 0.020408163
      %v915 = vmul.f32 %v725, 0.020408163
      %v916 = vmul.f32 %v728, 0.020408163
      %v917 = vmul.f32 %v731, 0.020408163
      %v918 = vmul.f32 %v734, 0.020408163
      %v919 = vmul.f32 %v737, 0.020408163
      %v920 = vmul.f32 %v740, 0.020408163
      %v921 = vmul.f32 %v743, 0.020408163
      %v922 = vmul.f32 %v746, 0.020408163
      %v923 = vmul.f32 %v749, 0.020408163
      %v924 = vmul.f32 %v752, 0.020408163
      %v925 = vmul.f32 %v755, 0.020408163
      %v926 = vmul.f32 %v758, 0.020408163
      %v927 = vmul.f32 %v761, 0.020408163
      %v928 = vmul.f32 %v764, 0.020408163
      %v929 = vmul.f32 %v767, 0.020408163
      %v930 = vmul.f32 %v770, 0.020408163
      %v931 = vmul.f32 %v773, 0.020408163
      %v932 = vmul.f32 %v776, 0.020408163
      %v933 = vmul.f32 %v779, 0.020408163
      %v934 = vmul.f32 %v782, 0.020408163
      %v935 = vmul.f32 %v785, 0.020408163
      %v936 = vmul.f32 %v788, 0.020408163
      %v937 = vmul.f32 %v791, 0.020408163
      %v938 = vmul.f32 %v794, 0.020408163
      %v939 = vmul.f32 %v795, %v795
      %v940 = vmul.f32 %v796, %v796
      %v941 = vmul.f32 %v797, %v797
      %v942 = vmul.f32 %v798, %v798
      %v943 = vmul.f32 %v799, %v799
      %v944 = vmul.f32 %v800, %v800
      %v945 = vmul.f32 %v801, %v801
      %v946 = vmul.f32 %v802, %v802
      %v947 = vmul.f32 %v803, %v803
      %v948 = vmul.f32 %v804, %v804
      %v949 = vmul.f32 %v805, %v805
      %v950 = vmul.f32 %v806, %v806
      %v951 = vmul.f32 %v807, %v807
      %v952 = vmul.f32 %v808, %v808
      %v953 = vmul.f32 %v809, %v809
      %v954 = vmul.f32 %v810, %v810
      %v955 = vmul.f32 %v811, %v811
      %v956 = vmul.f32 %v812, %v812
      %v957 = vmul.f32 %v813, %v813
      %v958 = vmul.f32 %v814, %v814
      %v959 = vmul.f32 %v815, %v815
      %v960 = vmul.f32 %v816, %v816
      %v961 = vmul.f32 %v817, %v817
      %v962 = vmul.f32 %v818, %v818
      %v963 = vmul.f32 %v819, %v819
      %v964 = vmul.f32 %v820, %v820
      %v965 = vmul.f32 %v821, %v821
      %v966 = vmul.f32 %v822, %v822
      %v967 = vmul.f32 %v823, %v823
      %v968 = vmul.f32 %v824, %v824
      %v969 = vmul.f32 %v825, %v825
      %v970 = vmul.f32 %v826, %v826
      %v971 = vmul.f32 %v827, %v827
      %v972 = vmul.f32 %v828, %v828
      %v973 = vmul.f32 %v829, %v829
      %v974 = vmul.f32 %v830, %v830
      %v975 = vmul.f32 %v831, %v831
      %v976 = vmul.f32 %v832, %v832
      %v977 = vmul.f32 %v833, %v833
      %v978 = vmul.f32 %v834, %v834
      %v979 = vmul.f32 %v835, %v835
      %v980 = vmul.f32 %v836, %v836
      %v981 = vmul.f32 %v837, %v837
      %v982 = vmul.f32 %v838, %v838
      %v983 = vmul.f32 %v839, %v839
      %v984 = vmul.f32 %v840, %v840
      %v985 = vmul.f32 %v841, %v841
      %v986 = vmul.f32 %v842, %v842
      %v987 = vmul.f32 %v843, %v843
      %v988 = vmul.f32 %v844, %v844
      %v989 = vmul.f32 %v845, %v845
      %v990 = vmul.f32 %v846, %v846
      %v991 = vmul.f32 %v847, %v847
      %v992 = vmul.f32 %v848, %v848
      %v993 = vmul.f32 %v849, %v849
      %v994 = vmul.f32 %v850, %v850
      %v995 = vmul.f32 %v851, %v851
      %v996 = vmul.f32 %v852, %v852
      %v997 = vmul.f32 %v853, %v853
      %v998 = vmul.f32 %v854, %v854
      %v999 = vmul.f32 %v855, %v855
      %v1000 = vmul.f32 %v856, %v856
      %v1001 = vmul.f32 %v857, %v857
      %v1002 = vmul.f32 %v858, %v858
      %v1003 = vmul.f32 %v859, %v859
      %v1004 = vmul.f32 %v860, %v860
      %v1005 = vmul.f32 %v861, %v861
      %v1006 = vmul.f32 %v862, %v862
      %v1007 = vmul.f32 %v863, %v863
      %v1008 = vmul.f32 %v864, %v864
      %v1009 = vmul.f32 %v865, %v865
      %v1010 = vmul.f32 %v866, %v866
      %v1011 = vsub.f32 %v867, %v939
      %v1012 = vsub.f32 %v868, %v940
      %v1013 = vsub.f32 %v869, %v941
      %v1014 = vsub.f32 %v870, %v942
      %v1015 = vsub.f32 %v871, %v943
      %v1016 = vsub.f32 %v872, %v944
      %v1017 = vsub.f32 %v873, %v945
      %v1018 = vsub.f32 %v874, %v946
      %v1019 = vsub.f32 %v875, %v947
      %v1020 = vsub.f32 %v876, %v948
      %v1021 = vsub.f32 %v877, %v949
      %v1022 = vsub.f32 %v878, %v950
      %v1023 = vsub.f32 %v879, %v951
      %v1024 = vsub.f32 %v880, %v952
      %v1025 = vsub.f32 %v881, %v953
      %v1026 = vsub.f32 %v882, %v954
      %v1027 = vsub.f32 %v883, %v955
      %v1028 = vsub.f32 %v884, %v956
      %v1029 = vsub.f32 %v885, %v957
      %v1030 = vsub.f32 %v886, %v958
      %v1031 = vsub.f32 %v887, %v959
      %v1032 = vsub.f32 %v888, %v960
      %v1033 = vsub.f32 %v889, %v961
      %v1034 = vsub.f32 %v890, %v962
      %v1035 = vsub.f32 %v891, %v963
      %v1036 = vsub.f32 %v892, %v964
      %v1037 = vsub.f32 %v893, %v965
      %v1038 = vsub.f32 %v894, %v966
      %v1039 = vsub.f32 %v895, %v967
      %v1040 = vsub.f32 %v896, %v968
      %v1041 = vsub.f32 %v897, %v969
      %v1042 = vsub.f32 %v898, %v970
      %v1043 = vsub.f32 %v899, %v971
      %v1044 = vsub.f32 %v900, %v972
      %v1045 = vsub.f32 %v901, %v973
      %v1046 = vsub.f32 %v902, %v974
      %v1047 = vsub.f32 %v903, %v975
      %v1048 = vsub.f32 %v904, %v976
      %v1049 = vsub.f32 %v905, %v977
      %v1050 = vsub.f32 %v906, %v978
      %v1051 = vsub.f32 %v907, %v979
      %v1052 = vsub.f32 %v908, %v980
      %v1053 = vsub.f32 %v909, %v981
      %v1054 = vsub.f32 %v910, %v982
      %v1055 = vsub.f32 %v911, %v983
      %v1056 = vsub.f32 %v912, %v984
      %v1057 = vsub.f32 %v913, %v985
      %v1058 = vsub.f32 %v914, %v986
      %v1059 = vsub.f32 %v915, %v987
      %v1060 = vsub.f32 %v916, %v988
      %v1061 = vsub.f32 %v917, %v989
      %v1062 = vsub.f32 %v918, %v990
      %v1063 = vsub.f32 %v919, %v991
      %v1064 = vsub.f32 %v920, %v992
      %v1065 = vsub.f32 %v921, %v993
      %v1066 = vsub.f32 %v922, %v994
      %v1067 = vsub.f32 %v923, %v995
      %v1068 = vsub.f32 %v924, %v996
      %v1069 = vsub.f32 %v925, %v997
      %v1070 = vsub.f32 %v926, %v998
      %v1071 = vsub.f32 %v927, %v999
      %v1072 = vsub.f32 %v928, %v1000
      %v1073 = vsub.f32 %v929, %v1001
      %v1074 = vsub.f32 %v930, %v1002
      %v1075 = vsub.f32 %v931, %v1003
      %v1076 = vsub.f32 %v932, %v1004
      %v1077 = vsub.f32 %v933, %v1005
      %v1078 = vsub.f32 %v934, %v1006
      %v1079 = vsub.f32 %v935, %v1007
      %v1080 = vsub.f32 %v936, %v1008
      %v1081 = vsub.f32 %v937, %v1009
      %v1082 = vsub.f32 %v938, %v1010
      %v1083 = vmax.f32 %v1011, 0.0
      %v1084 = vmax.f32 %v1012, 0.0
      %v1085 = vmax.f32 %v1013, 0.0
      %v1086 = vmax.f32 %v1014, 0.0
      %v1087 = vmax.f32 %v1015, 0.0
      %v1088 = vmax.f32 %v1016, 0.0
      %v1089 = vmax.f32 %v1017, 0.0
      %v1090 = vmax.f32 %v1018, 0.0
      %v1091 = vmax.f32 %v1019, 0.0
      %v1092 = vmax.f32 %v1020, 0.0
      %v1093 = vmax.f32 %v1021, 0.0
      %v1094 = vmax.f32 %v1022, 0.0
      %v1095 = vmax.f32 %v1023, 0.0
      %v1096 = vmax.f32 %v1024, 0.0
      %v1097 = vmax.f32 %v1025, 0.0
      %v1098 = vmax.f32 %v1026, 0.0
      %v1099 = vmax.f32 %v1027, 0.0
      %v1100 = vmax.f32 %v1028, 0.0
      %v1101 = vmax.f32 %v1029, 0.0
      %v1102 = vmax.f32 %v1030, 0.0
      %v1103 = vmax.f32 %v1031, 0.0
      %v1104 = vmax.f32 %v1032, 0.0
      %v1105 = vmax.f32 %v1033, 0.0
      %v1106 = vmax.f32 %v1034, 0.0
      %v1107 = vmax.f32 %v1035, 0.0
      %v1108 = vmax.f32 %v1036, 0.0
      %v1109 = vmax.f32 %v1037, 0.0
      %v1110 = vmax.f32 %v1038, 0.0
      %v1111 = vmax.f32 %v1039, 0.0
      %v1112 = vmax.f32 %v1040, 0.0
      %v1113 = vmax.f32 %v1041, 0.0
      %v1114 = vmax.f32 %v1042, 0.0
      %v1115 = vmax.f32 %v1043, 0.0
      %v1116 = vmax.f32 %v1044, 0.0
      %v1117 = vmax.f32 %v1045, 0.0
      %v1118 = vmax.f32 %v1046, 0.0
      %v1119 = vmax.f32 %v1047, 0.0
      %v1120 = vmax.f32 %v1048, 0.0
      %v1121 = vmax.f32 %v1049, 0.0
      %v1122 = vmax.f32 %v1050, 0.0
      %v1123 = vmax.f32 %v1051, 0.0
      %v1124 = vmax.f32 %v1052, 0.0
      %v1125 = vmax.f32 %v1053, 0.0
      %v1126 = vmax.f32 %v1054, 0.0
      %v1127 = vmax.f32 %v1055, 0.0
      %v1128 = vmax.f32 %v1056, 0.0
      %v1129 = vmax.f32 %v1057, 0.0
      %v1130 = vmax.f32 %v1058, 0.0
      %v1131 = vmax.f32 %v1059, 0.0
      %v1132 = vmax.f32 %v1060, 0.0
      %v1133 = vmax.f32 %v1061, 0.0
      %v1134 = vmax.f32 %v1062, 0.0
      %v1135 = vmax.f32 %v1063, 0.0
      %v1136 = vmax.f32 %v1064, 0.0
      %v1137 = vmax.f32 %v1065, 0.0
      %v1138 = vmax.f32 %v1066, 0.0
      %v1139 = vmax.f32 %v1067, 0.0
      %v1140 = vmax.f32 %v1068, 0.0
      %v1141 = vmax.f32 %v1069, 0.0
      %v1142 = vmax.f32 %v1070, 0.0
      %v1143 = vmax.f32 %v1071, 0.0
      %v1144 = vmax.f32 %v1072, 0.0
      %v1145 = vmax.f32 %v1073, 0.0
      %v1146 = vmax.f32 %v1074, 0.0
      %v1147 = vmax.f32 %v1075, 0.0
      %v1148 = vmax.f32 %v1076, 0.0
      %v1149 = vmax.f32 %v1077, 0.0
      %v1150 = vmax.f32 %v1078, 0.0
      %v1151 = vmax.f32 %v1079, 0.0
      %v1152 = vmax.f32 %v1080, 0.0
      %v1153 = vmax.f32 %v1081, 0.0
      %v1154 = vmax.f32 %v1082, 0.0
      %v1155 = vadd.f32 %v1083, 1e-05
      %v1156 = vadd.f32 %v1084, 1e-05
      %v1157 = vadd.f32 %v1085, 1e-05
      %v1158 = vadd.f32 %v1086, 1e-05
      %v1159 = vadd.f32 %v1087, 1e-05
      %v1160 = vadd.f32 %v1088, 1e-05
      %v1161 = vadd.f32 %v1089, 1e-05
      %v1162 = vadd.f32 %v1090, 1e-05
      %v1163 = vadd.f32 %v1091, 1e-05
      %v1164 = vadd.f32 %v1092, 1e-05
      %v1165 = vadd.f32 %v1093, 1e-05
      %v1166 = vadd.f32 %v1094, 1e-05
      %v1167 = vadd.f32 %v1095, 1e-05
      %v1168 = vadd.f32 %v1096, 1e-05
      %v1169 = vadd.f32 %v1097, 1e-05
      %v1170 = vadd.f32 %v1098, 1e-05
      %v1171 = vadd.f32 %v1099, 1e-05
      %v1172 = vadd.f32 %v1100, 1e-05
      %v1173 = vadd.f32 %v1101, 1e-05
      %v1174 = vadd.f32 %v1102, 1e-05
      %v1175 = vadd.f32 %v1103, 1e-05
      %v1176 = vadd.f32 %v1104, 1e-05
      %v1177 = vadd.f32 %v1105, 1e-05
      %v1178 = vadd.f32 %v1106, 1e-05
      %v1179 = vadd.f32 %v1107, 1e-05
      %v1180 = vadd.f32 %v1108, 1e-05
      %v1181 = vadd.f32 %v1109, 1e-05
      %v1182 = vadd.f32 %v1110, 1e-05
      %v1183 = vadd.f32 %v1111, 1e-05
      %v1184 = vadd.f32 %v1112, 1e-05
      %v1185 = vadd.f32 %v1113, 1e-05
      %v1186 = vadd.f32 %v1114, 1e-05
      %v1187 = vadd.f32 %v1115, 1e-05
      %v1188 = vadd.f32 %v1116, 1e-05
      %v1189 = vadd.f32 %v1117, 1e-05
      %v1190 = vadd.f32 %v1118, 1e-05
      %v1191 = vadd.f32 %v1119, 1e-05
      %v1192 = vadd.f32 %v1120, 1e-05
      %v1193 = vadd.f32 %v1121, 1e-05
      %v1194 = vadd.f32 %v1122, 1e-05
      %v1195 = vadd.f32 %v1123, 1e-05
      %v1196 = vadd.f32 %v1124, 1e-05
      %v1197 = vadd.f32 %v1125, 1e-05
      %v1198 = vadd.f32 %v1126, 1e-05
      %v1199 = vadd.f32 %v1127, 1e-05
      %v1200 = vadd.f32 %v1128, 1e-05
      %v1201 = vadd.f32 %v1129, 1e-05
      %v1202 = vadd.f32 %v1130, 1e-05
      %v1203 = vadd.f32 %v1131, 1e-05
      %v1204 = vadd.f32 %v1132, 1e-05
      %v1205 = vadd.f32 %v1133, 1e-05
      %v1206 = vadd.f32 %v1134, 1e-05
      %v1207 = vadd.f32 %v1135, 1e-05
      %v1208 = vadd.f32 %v1136, 1e-05
      %v1209 = vadd.f32 %v1137, 1e-05
      %v1210 = vadd.f32 %v1138, 1e-05
      %v1211 = vadd.f32 %v1139, 1e-05
      %v1212 = vadd.f32 %v1140, 1e-05
      %v1213 = vadd.f32 %v1141, 1e-05
      %v1214 = vadd.f32 %v1142, 1e-05
      %v1215 = vadd.f32 %v1143, 1e-05
      %v1216 = vadd.f32 %v1144, 1e-05
      %v1217 = vadd.f32 %v1145, 1e-05
      %v1218 = vadd.f32 %v1146, 1e-05
      %v1219 = vadd.f32 %v1147, 1e-05
      %v1220 = vadd.f32 %v1148, 1e-05
      %v1221 = vadd.f32 %v1149, 1e-05
      %v1222 = vadd.f32 %v1150, 1e-05
      %v1223 = vadd.f32 %v1151, 1e-05
      %v1224 = vadd.f32 %v1152, 1e-05
      %v1225 = vadd.f32 %v1153, 1e-05
      %v1226 = vadd.f32 %v1154, 1e-05
      %v1227 = vrsqrt.pop %v1155
      %v1228 = vmul.f32 %v1227, %v1155
      %v1229 = vmul.f32 %v1228, %v1227
      %v1230 = vmul.f32 0.5, %v1229
      %v1231 = vsub.f32 1.5, %v1230
      %v1232 = vmul.f32 %v1227, %v1231
      %vm1233 = vweird.f32 %v1155
      %vm1234 = vweird.f32 %v1227
      %vm1235 = vmor %vm1233, %vm1234
      %v1236 = vsel %vm1235, %v1227, %v1232
      %v1237 = vrsqrt.pop %v1156
      %v1238 = vmul.f32 %v1237, %v1156
      %v1239 = vmul.f32 %v1238, %v1237
      %v1240 = vmul.f32 0.5, %v1239
      %v1241 = vsub.f32 1.5, %v1240
      %v1242 = vmul.f32 %v1237, %v1241
      %vm1243 = vweird.f32 %v1156
      %vm1244 = vweird.f32 %v1237
      %vm1245 = vmor %vm1243, %vm1244
      %v1246 = vsel %vm1245, %v1237, %v1242
      %v1247 = vrsqrt.pop %v1157
      %v1248 = vmul.f32 %v1247, %v1157
      %v1249 = vmul.f32 %v1248, %v1247
      %v1250 = vmul.f32 0.5, %v1249
      %v1251 = vsub.f32 1.5, %v1250
      %v1252 = vmul.f32 %v1247, %v1251
      %vm1253 = vweird.f32 %v1157
      %vm1254 = vweird.f32 %v1247
      %vm1255 = vmor %vm1253, %vm1254
      %v1256 = vsel %vm1255, %v1247, %v1252
      %v1257 = vrsqrt.pop %v1158
      %v1258 = vmul.f32 %v1257, %v1158
      %v1259 = vmul.f32 %v1258, %v1257
      %v1260 = vmul.f32 0.5, %v1259
      %v1261 = vsub.f32 1.5, %v1260
      %v1262 = vmul.f32 %v1257, %v1261
      %vm1263 = vweird.f32 %v1158
      %vm1264 = vweird.f32 %v1257
      %vm1265 = vmor %vm1263, %vm1264
      %v1266 = vsel %vm1265, %v1257, %v1262
      %v1267 = vrsqrt.pop %v1159
      %v1268 = vmul.f32 %v1267, %v1159
      %v1269 = vmul.f32 %v1268, %v1267
      %v1270 = vmul.f32 0.5, %v1269
      %v1271 = vsub.f32 1.5, %v1270
      %v1272 = vmul.f32 %v1267, %v1271
      %vm1273 = vweird.f32 %v1159
      %vm1274 = vweird.f32 %v1267
      %vm1275 = vmor %vm1273, %vm1274
      %v1276 = vsel %vm1275, %v1267, %v1272
      %v1277 = vrsqrt.pop %v1160
      %v1278 = vmul.f32 %v1277, %v1160
      %v1279 = vmul.f32 %v1278, %v1277
      %v1280 = vmul.f32 0.5, %v1279
      %v1281 = vsub.f32 1.5, %v1280
      %v1282 = vmul.f32 %v1277, %v1281
      %vm1283 = vweird.f32 %v1160
      %vm1284 = vweird.f32 %v1277
      %vm1285 = vmor %vm1283, %vm1284
      %v1286 = vsel %vm1285, %v1277, %v1282
      %v1287 = vrsqrt.pop %v1161
      %v1288 = vmul.f32 %v1287, %v1161
      %v1289 = vmul.f32 %v1288, %v1287
      %v1290 = vmul.f32 0.5, %v1289
      %v1291 = vsub.f32 1.5, %v1290
      %v1292 = vmul.f32 %v1287, %v1291
      %vm1293 = vweird.f32 %v1161
      %vm1294 = vweird.f32 %v1287
      %vm1295 = vmor %vm1293, %vm1294
      %v1296 = vsel %vm1295, %v1287, %v1292
      %v1297 = vrsqrt.pop %v1162
      %v1298 = vmul.f32 %v1297, %v1162
      %v1299 = vmul.f32 %v1298, %v1297
      %v1300 = vmul.f32 0.5, %v1299
      %v1301 = vsub.f32 1.5, %v1300
      %v1302 = vmul.f32 %v1297, %v1301
      %vm1303 = vweird.f32 %v1162
      %vm1304 = vweird.f32 %v1297
      %vm1305 = vmor %vm1303, %vm1304
      %v1306 = vsel %vm1305, %v1297, %v1302
      %v1307 = vrsqrt.pop %v1163
      %v1308 = vmul.f32 %v1307, %v1163
      %v1309 = vmul.f32 %v1308, %v1307
      %v1310 = vmul.f32 0.5, %v1309
      %v1311 = vsub.f32 1.5, %v1310
      %v1312 = vmul.f32 %v1307, %v1311
      %vm1313 = vweird.f32 %v1163
      %vm1314 = vweird.f32 %v1307
      %vm1315 = vmor %vm1313, %vm1314
      %v1316 = vsel %vm1315, %v1307, %v1312
      %v1317 = vrsqrt.pop %v1164
      %v1318 = vmul.f32 %v1317, %v1164
      %v1319 = vmul.f32 %v1318, %v1317
      %v1320 = vmul.f32 0.5, %v1319
      %v1321 = vsub.f32 1.5, %v1320
      %v1322 = vmul.f32 %v1317, %v1321
      %vm1323 = vweird.f32 %v1164
      %vm1324 = vweird.f32 %v1317
      %vm1325 = vmor %vm1323, %vm1324
      %v1326 = vsel %vm1325, %v1317, %v1322
      %v1327 = vrsqrt.pop %v1165
      %v1328 = vmul.f32 %v1327, %v1165
      %v1329 = vmul.f32 %v1328, %v1327
      %v1330 = vmul.f32 0.5, %v1329
      %v1331 = vsub.f32 1.5, %v1330
      %v1332 = vmul.f32 %v1327, %v1331
      %vm1333 = vweird.f32 %v1165
      %vm1334 = vweird.f32 %v1327
      %vm1335 = vmor %vm1333, %vm1334
      %v1336 = vsel %vm1335, %v1327, %v1332
      %v1337 = vrsqrt.pop %v1166
      %v1338 = vmul.f32 %v1337, %v1166
      %v1339 = vmul.f32 %v1338, %v1337
      %v1340 = vmul.f32 0.5, %v1339
      %v1341 = vsub.f32 1.5, %v1340
      %v1342 = vmul.f32 %v1337, %v1341
      %vm1343 = vweird.f32 %v1166
      %vm1344 = vweird.f32 %v1337
      %vm1345 = vmor %vm1343, %vm1344
      %v1346 = vsel %vm1345, %v1337, %v1342
      %v1347 = vrsqrt.pop %v1167
      %v1348 = vmul.f32 %v1347, %v1167
      %v1349 = vmul.f32 %v1348, %v1347
      %v1350 = vmul.f32 0.5, %v1349
      %v1351 = vsub.f32 1.5, %v1350
      %v1352 = vmul.f32 %v1347, %v1351
      %vm1353 = vweird.f32 %v1167
      %vm1354 = vweird.f32 %v1347
      %vm1355 = vmor %vm1353, %vm1354
      %v1356 = vsel %vm1355, %v1347, %v1352
      %v1357 = vrsqrt.pop %v1168
      %v1358 = vmul.f32 %v1357, %v1168
      %v1359 = vmul.f32 %v1358, %v1357
      %v1360 = vmul.f32 0.5, %v1359
      %v1361 = vsub.f32 1.5, %v1360
      %v1362 = vmul.f32 %v1357, %v1361
      %vm1363 = vweird.f32 %v1168
      %vm1364 = vweird.f32 %v1357
      %vm1365 = vmor %vm1363, %vm1364
      %v1366 = vsel %vm1365, %v1357, %v1362
      %v1367 = vrsqrt.pop %v1169
      %v1368 = vmul.f32 %v1367, %v1169
      %v1369 = vmul.f32 %v1368, %v1367
      %v1370 = vmul.f32 0.5, %v1369
      %v1371 = vsub.f32 1.5, %v1370
      %v1372 = vmul.f32 %v1367, %v1371
      %vm1373 = vweird.f32 %v1169
      %vm1374 = vweird.f32 %v1367
      %vm1375 = vmor %vm1373, %vm1374
      %v1376 = vsel %vm1375, %v1367, %v1372
      %v1377 = vrsqrt.pop %v1170
      %v1378 = vmul.f32 %v1377, %v1170
      %v1379 = vmul.f32 %v1378, %v1377
      %v1380 = vmul.f32 0.5, %v1379
      %v1381 = vsub.f32 1.5, %v1380
      %v1382 = vmul.f32 %v1377, %v1381
      %vm1383 = vweird.f32 %v1170
      %vm1384 = vweird.f32 %v1377
      %vm1385 = vmor %vm1383, %vm1384
      %v1386 = vsel %vm1385, %v1377, %v1382
      %v1387 = vrsqrt.pop %v1171
      %v1388 = vmul.f32 %v1387, %v1171
      %v1389 = vmul.f32 %v1388, %v1387
      %v1390 = vmul.f32 0.5, %v1389
      %v1391 = vsub.f32 1.5, %v1390
      %v1392 = vmul.f32 %v1387, %v1391
      %vm1393 = vweird.f32 %v1171
      %vm1394 = vweird.f32 %v1387
      %vm1395 = vmor %vm1393, %vm1394
      %v1396 = vsel %vm1395, %v1387, %v1392
      %v1397 = vrsqrt.pop %v1172
      %v1398 = vmul.f32 %v1397, %v1172
      %v1399 = vmul.f32 %v1398, %v1397
      %v1400 = vmul.f32 0.5, %v1399
      %v1401 = vsub.f32 1.5, %v1400
      %v1402 = vmul.f32 %v1397, %v1401
      %vm1403 = vweird.f32 %v1172
      %vm1404 = vweird.f32 %v1397
      %vm1405 = vmor %vm1403, %vm1404
      %v1406 = vsel %vm1405, %v1397, %v1402
      %v1407 = vrsqrt.pop %v1173
      %v1408 = vmul.f32 %v1407, %v1173
      %v1409 = vmul.f32 %v1408, %v1407
      %v1410 = vmul.f32 0.5, %v1409
      %v1411 = vsub.f32 1.5, %v1410
      %v1412 = vmul.f32 %v1407, %v1411
      %vm1413 = vweird.f32 %v1173
      %vm1414 = vweird.f32 %v1407
      %vm1415 = vmor %vm1413, %vm1414
      %v1416 = vsel %vm1415, %v1407, %v1412
      %v1417 = vrsqrt.pop %v1174
      %v1418 = vmul.f32 %v1417, %v1174
      %v1419 = vmul.f32 %v1418, %v1417
      %v1420 = vmul.f32 0.5, %v1419
      %v1421 = vsub.f32 1.5, %v1420
      %v1422 = vmul.f32 %v1417, %v1421
      %vm1423 = vweird.f32 %v1174
      %vm1424 = vweird.f32 %v1417
      %vm1425 = vmor %vm1423, %vm1424
      %v1426 = vsel %vm1425, %v1417, %v1422
      %v1427 = vrsqrt.pop %v1175
      %v1428 = vmul.f32 %v1427, %v1175
      %v1429 = vmul.f32 %v1428, %v1427
      %v1430 = vmul.f32 0.5, %v1429
      %v1431 = vsub.f32 1.5, %v1430
      %v1432 = vmul.f32 %v1427, %v1431
      %vm1433 = vweird.f32 %v1175
      %vm1434 = vweird.f32 %v1427
      %vm1435 = vmor %vm1433, %vm1434
      %v1436 = vsel %vm1435, %v1427, %v1432
      %v1437 = vrsqrt.pop %v1176
      %v1438 = vmul.f32 %v1437, %v1176
      %v1439 = vmul.f32 %v1438, %v1437
      %v1440 = vmul.f32 0.5, %v1439
      %v1441 = vsub.f32 1.5, %v1440
      %v1442 = vmul.f32 %v1437, %v1441
      %vm1443 = vweird.f32 %v1176
      %vm1444 = vweird.f32 %v1437
      %vm1445 = vmor %vm1443, %vm1444
      %v1446 = vsel %vm1445, %v1437, %v1442
      %v1447 = vrsqrt.pop %v1177
      %v1448 = vmul.f32 %v1447, %v1177
      %v1449 = vmul.f32 %v1448, %v1447
      %v1450 = vmul.f32 0.5, %v1449
      %v1451 = vsub.f32 1.5, %v1450
      %v1452 = vmul.f32 %v1447, %v1451
      %vm1453 = vweird.f32 %v1177
      %vm1454 = vweird.f32 %v1447
      %vm1455 = vmor %vm1453, %vm1454
      %v1456 = vsel %vm1455, %v1447, %v1452
      %v1457 = vrsqrt.pop %v1178
      %v1458 = vmul.f32 %v1457, %v1178
      %v1459 = vmul.f32 %v1458, %v1457
      %v1460 = vmul.f32 0.5, %v1459
      %v1461 = vsub.f32 1.5, %v1460
      %v1462 = vmul.f32 %v1457, %v1461
      %vm1463 = vweird.f32 %v1178
      %vm1464 = vweird.f32 %v1457
      %vm1465 = vmor %vm1463, %vm1464
      %v1466 = vsel %vm1465, %v1457, %v1462
      %v1467 = vrsqrt.pop %v1179
      %v1468 = vmul.f32 %v1467, %v1179
      %v1469 = vmul.f32 %v1468, %v1467
      %v1470 = vmul.f32 0.5, %v1469
      %v1471 = vsub.f32 1.5, %v1470
      %v1472 = vmul.f32 %v1467, %v1471
      %vm1473 = vweird.f32 %v1179
      %vm1474 = vweird.f32 %v1467
      %vm1475 = vmor %vm1473, %vm1474
      %v1476 = vsel %vm1475, %v1467, %v1472
      %v1477 = vrsqrt.pop %v1180
      %v1478 = vmul.f32 %v1477, %v1180
      %v1479 = vmul.f32 %v1478, %v1477
      %v1480 = vmul.f32 0.5, %v1479
      %v1481 = vsub.f32 1.5, %v1480
      %v1482 = vmul.f32 %v1477, %v1481
      %vm1483 = vweird.f32 %v1180
      %vm1484 = vweird.f32 %v1477
      %vm1485 = vmor %vm1483, %vm1484
      %v1486 = vsel %vm1485, %v1477, %v1482
      %v1487 = vrsqrt.pop %v1181
      %v1488 = vmul.f32 %v1487, %v1181
      %v1489 = vmul.f32 %v1488, %v1487
      %v1490 = vmul.f32 0.5, %v1489
      %v1491 = vsub.f32 1.5, %v1490
      %v1492 = vmul.f32 %v1487, %v1491
      %vm1493 = vweird.f32 %v1181
      %vm1494 = vweird.f32 %v1487
      %vm1495 = vmor %vm1493, %vm1494
      %v1496 = vsel %vm1495, %v1487, %v1492
      %v1497 = vrsqrt.pop %v1182
      %v1498 = vmul.f32 %v1497, %v1182
      %v1499 = vmul.f32 %v1498, %v1497
      %v1500 = vmul.f32 0.5, %v1499
      %v1501 = vsub.f32 1.5, %v1500
      %v1502 = vmul.f32 %v1497, %v1501
      %vm1503 = vweird.f32 %v1182
      %vm1504 = vweird.f32 %v1497
      %vm1505 = vmor %vm1503, %vm1504
      %v1506 = vsel %vm1505, %v1497, %v1502
      %v1507 = vrsqrt.pop %v1183
      %v1508 = vmul.f32 %v1507, %v1183
      %v1509 = vmul.f32 %v1508, %v1507
      %v1510 = vmul.f32 0.5, %v1509
      %v1511 = vsub.f32 1.5, %v1510
      %v1512 = vmul.f32 %v1507, %v1511
      %vm1513 = vweird.f32 %v1183
      %vm1514 = vweird.f32 %v1507
      %vm1515 = vmor %vm1513, %vm1514
      %v1516 = vsel %vm1515, %v1507, %v1512
      %v1517 = vrsqrt.pop %v1184
      %v1518 = vmul.f32 %v1517, %v1184
      %v1519 = vmul.f32 %v1518, %v1517
      %v1520 = vmul.f32 0.5, %v1519
      %v1521 = vsub.f32 1.5, %v1520
      %v1522 = vmul.f32 %v1517, %v1521
      %vm1523 = vweird.f32 %v1184
      %vm1524 = vweird.f32 %v1517
      %vm1525 = vmor %vm1523, %vm1524
      %v1526 = vsel %vm1525, %v1517, %v1522
      %v1527 = vrsqrt.pop %v1185
      %v1528 = vmul.f32 %v1527, %v1185
      %v1529 = vmul.f32 %v1528, %v1527
      %v1530 = vmul.f32 0.5, %v1529
      %v1531 = vsub.f32 1.5, %v1530
      %v1532 = vmul.f32 %v1527, %v1531
      %vm1533 = vweird.f32 %v1185
      %vm1534 = vweird.f32 %v1527
      %vm1535 = vmor %vm1533, %vm1534
      %v1536 = vsel %vm1535, %v1527, %v1532
      %v1537 = vrsqrt.pop %v1186
      %v1538 = vmul.f32 %v1537, %v1186
      %v1539 = vmul.f32 %v1538, %v1537
      %v1540 = vmul.f32 0.5, %v1539
      %v1541 = vsub.f32 1.5, %v1540
      %v1542 = vmul.f32 %v1537, %v1541
      %vm1543 = vweird.f32 %v1186
      %vm1544 = vweird.f32 %v1537
      %vm1545 = vmor %vm1543, %vm1544
      %v1546 = vsel %vm1545, %v1537, %v1542
      %v1547 = vrsqrt.pop %v1187
      %v1548 = vmul.f32 %v1547, %v1187
      %v1549 = vmul.f32 %v1548, %v1547
      %v1550 = vmul.f32 0.5, %v1549
      %v1551 = vsub.f32 1.5, %v1550
      %v1552 = vmul.f32 %v1547, %v1551
      %vm1553 = vweird.f32 %v1187
      %vm1554 = vweird.f32 %v1547
      %vm1555 = vmor %vm1553, %vm1554
      %v1556 = vsel %vm1555, %v1547, %v1552
      %v1557 = vrsqrt.pop %v1188
      %v1558 = vmul.f32 %v1557, %v1188
      %v1559 = vmul.f32 %v1558, %v1557
      %v1560 = vmul.f32 0.5, %v1559
      %v1561 = vsub.f32 1.5, %v1560
      %v1562 = vmul.f32 %v1557, %v1561
      %vm1563 = vweird.f32 %v1188
      %vm1564 = vweird.f32 %v1557
      %vm1565 = vmor %vm1563, %vm1564
      %v1566 = vsel %vm1565, %v1557, %v1562
      %v1567 = vrsqrt.pop %v1189
      %v1568 = vmul.f32 %v1567, %v1189
      %v1569 = vmul.f32 %v1568, %v1567
      %v1570 = vmul.f32 0.5, %v1569
      %v1571 = vsub.f32 1.5, %v1570
      %v1572 = vmul.f32 %v1567, %v1571
      %vm1573 = vweird.f32 %v1189
      %vm1574 = vweird.f32 %v1567
      %vm1575 = vmor %vm1573, %vm1574
      %v1576 = vsel %vm1575, %v1567, %v1572
      %v1577 = vrsqrt.pop %v1190
      %v1578 = vmul.f32 %v1577, %v1190
      %v1579 = vmul.f32 %v1578, %v1577
      %v1580 = vmul.f32 0.5, %v1579
      %v1581 = vsub.f32 1.5, %v1580
      %v1582 = vmul.f32 %v1577, %v1581
      %vm1583 = vweird.f32 %v1190
      %vm1584 = vweird.f32 %v1577
      %vm1585 = vmor %vm1583, %vm1584
      %v1586 = vsel %vm1585, %v1577, %v1582
      %v1587 = vrsqrt.pop %v1191
      %v1588 = vmul.f32 %v1587, %v1191
      %v1589 = vmul.f32 %v1588, %v1587
      %v1590 = vmul.f32 0.5, %v1589
      %v1591 = vsub.f32 1.5, %v1590
      %v1592 = vmul.f32 %v1587, %v1591
      %vm1593 = vweird.f32 %v1191
      %vm1594 = vweird.f32 %v1587
      %vm1595 = vmor %vm1593, %vm1594
      %v1596 = vsel %vm1595, %v1587, %v1592
      %v1597 = vrsqrt.pop %v1192
      %v1598 = vmul.f32 %v1597, %v1192
      %v1599 = vmul.f32 %v1598, %v1597
      %v1600 = vmul.f32 0.5, %v1599
      %v1601 = vsub.f32 1.5, %v1600
      %v1602 = vmul.f32 %v1597, %v1601
      %vm1603 = vweird.f32 %v1192
      %vm1604 = vweird.f32 %v1597
      %vm1605 = vmor %vm1603, %vm1604
      %v1606 = vsel %vm1605, %v1597, %v1602
      %v1607 = vrsqrt.pop %v1193
      %v1608 = vmul.f32 %v1607, %v1193
      %v1609 = vmul.f32 %v1608, %v1607
      %v1610 = vmul.f32 0.5, %v1609
      %v1611 = vsub.f32 1.5, %v1610
      %v1612 = vmul.f32 %v1607, %v1611
      %vm1613 = vweird.f32 %v1193
      %vm1614 = vweird.f32 %v1607
      %vm1615 = vmor %vm1613, %vm1614
      %v1616 = vsel %vm1615, %v1607, %v1612
      %v1617 = vrsqrt.pop %v1194
      %v1618 = vmul.f32 %v1617, %v1194
      %v1619 = vmul.f32 %v1618, %v1617
      %v1620 = vmul.f32 0.5, %v1619
      %v1621 = vsub.f32 1.5, %v1620
      %v1622 = vmul.f32 %v1617, %v1621
      %vm1623 = vweird.f32 %v1194
      %vm1624 = vweird.f32 %v1617
      %vm1625 = vmor %vm1623, %vm1624
      %v1626 = vsel %vm1625, %v1617, %v1622
      %v1627 = vrsqrt.pop %v1195
      %v1628 = vmul.f32 %v1627, %v1195
      %v1629 = vmul.f32 %v1628, %v1627
      %v1630 = vmul.f32 0.5, %v1629
      %v1631 = vsub.f32 1.5, %v1630
      %v1632 = vmul.f32 %v1627, %v1631
      %vm1633 = vweird.f32 %v1195
      %vm1634 = vweird.f32 %v1627
      %vm1635 = vmor %vm1633, %vm1634
      %v1636 = vsel %vm1635, %v1627, %v1632
      %v1637 = vrsqrt.pop %v1196
      %v1638 = vmul.f32 %v1637, %v1196
      %v1639 = vmul.f32 %v1638, %v1637
      %v1640 = vmul.f32 0.5, %v1639
      %v1641 = vsub.f32 1.5, %v1640
      %v1642 = vmul.f32 %v1637, %v1641
      %vm1643 = vweird.f32 %v1196
      %vm1644 = vweird.f32 %v1637
      %vm1645 = vmor %vm1643, %vm1644
      %v1646 = vsel %vm1645, %v1637, %v1642
      %v1647 = vrsqrt.pop %v1197
      %v1648 = vmul.f32 %v1647, %v1197
      %v1649 = vmul.f32 %v1648, %v1647
      %v1650 = vmul.f32 0.5, %v1649
      %v1651 = vsub.f32 1.5, %v1650
      %v1652 = vmul.f32 %v1647, %v1651
      %vm1653 = vweird.f32 %v1197
      %vm1654 = vweird.f32 %v1647
      %vm1655 = vmor %vm1653, %vm1654
      %v1656 = vsel %vm1655, %v1647, %v1652
      %v1657 = vrsqrt.pop %v1198
      %v1658 = vmul.f32 %v1657, %v1198
      %v1659 = vmul.f32 %v1658, %v1657
      %v1660 = vmul.f32 0.5, %v1659
      %v1661 = vsub.f32 1.5, %v1660
      %v1662 = vmul.f32 %v1657, %v1661
      %vm1663 = vweird.f32 %v1198
      %vm1664 = vweird.f32 %v1657
      %vm1665 = vmor %vm1663, %vm1664
      %v1666 = vsel %vm1665, %v1657, %v1662
      %v1667 = vrsqrt.pop %v1199
      %v1668 = vmul.f32 %v1667, %v1199
      %v1669 = vmul.f32 %v1668, %v1667
      %v1670 = vmul.f32 0.5, %v1669
      %v1671 = vsub.f32 1.5, %v1670
      %v1672 = vmul.f32 %v1667, %v1671
      %vm1673 = vweird.f32 %v1199
      %vm1674 = vweird.f32 %v1667
      %vm1675 = vmor %vm1673, %vm1674
      %v1676 = vsel %vm1675, %v1667, %v1672
      %v1677 = vrsqrt.pop %v1200
      %v1678 = vmul.f32 %v1677, %v1200
      %v1679 = vmul.f32 %v1678, %v1677
      %v1680 = vmul.f32 0.5, %v1679
      %v1681 = vsub.f32 1.5, %v1680
      %v1682 = vmul.f32 %v1677, %v1681
      %vm1683 = vweird.f32 %v1200
      %vm1684 = vweird.f32 %v1677
      %vm1685 = vmor %vm1683, %vm1684
      %v1686 = vsel %vm1685, %v1677, %v1682
      %v1687 = vrsqrt.pop %v1201
      %v1688 = vmul.f32 %v1687, %v1201
      %v1689 = vmul.f32 %v1688, %v1687
      %v1690 = vmul.f32 0.5, %v1689
      %v1691 = vsub.f32 1.5, %v1690
      %v1692 = vmul.f32 %v1687, %v1691
      %vm1693 = vweird.f32 %v1201
      %vm1694 = vweird.f32 %v1687
      %vm1695 = vmor %vm1693, %vm1694
      %v1696 = vsel %vm1695, %v1687, %v1692
      %v1697 = vrsqrt.pop %v1202
      %v1698 = vmul.f32 %v1697, %v1202
      %v1699 = vmul.f32 %v1698, %v1697
      %v1700 = vmul.f32 0.5, %v1699
      %v1701 = vsub.f32 1.5, %v1700
      %v1702 = vmul.f32 %v1697, %v1701
      %vm1703 = vweird.f32 %v1202
      %vm1704 = vweird.f32 %v1697
      %vm1705 = vmor %vm1703, %vm1704
      %v1706 = vsel %vm1705, %v1697, %v1702
      %v1707 = vrsqrt.pop %v1203
      %v1708 = vmul.f32 %v1707, %v1203
      %v1709 = vmul.f32 %v1708, %v1707
      %v1710 = vmul.f32 0.5, %v1709
      %v1711 = vsub.f32 1.5, %v1710
      %v1712 = vmul.f32 %v1707, %v1711
      %vm1713 = vweird.f32 %v1203
      %vm1714 = vweird.f32 %v1707
      %vm1715 = vmor %vm1713, %vm1714
      %v1716 = vsel %vm1715, %v1707, %v1712
      %v1717 = vrsqrt.pop %v1204
      %v1718 = vmul.f32 %v1717, %v1204
      %v1719 = vmul.f32 %v1718, %v1717
      %v1720 = vmul.f32 0.5, %v1719
      %v1721 = vsub.f32 1.5, %v1720
      %v1722 = vmul.f32 %v1717, %v1721
      %vm1723 = vweird.f32 %v1204
      %vm1724 = vweird.f32 %v1717
      %vm1725 = vmor %vm1723, %vm1724
      %v1726 = vsel %vm1725, %v1717, %v1722
      %v1727 = vrsqrt.pop %v1205
      %v1728 = vmul.f32 %v1727, %v1205
      %v1729 = vmul.f32 %v1728, %v1727
      %v1730 = vmul.f32 0.5, %v1729
      %v1731 = vsub.f32 1.5, %v1730
      %v1732 = vmul.f32 %v1727, %v1731
      %vm1733 = vweird.f32 %v1205
      %vm1734 = vweird.f32 %v1727
      %vm1735 = vmor %vm1733, %vm1734
      %v1736 = vsel %vm1735, %v1727, %v1732
      %v1737 = vrsqrt.pop %v1206
      %v1738 = vmul.f32 %v1737, %v1206
      %v1739 = vmul.f32 %v1738, %v1737
      %v1740 = vmul.f32 0.5, %v1739
      %v1741 = vsub.f32 1.5, %v1740
      %v1742 = vmul.f32 %v1737, %v1741
      %vm1743 = vweird.f32 %v1206
      %vm1744 = vweird.f32 %v1737
      %vm1745 = vmor %vm1743, %vm1744
      %v1746 = vsel %vm1745, %v1737, %v1742
      %v1747 = vrsqrt.pop %v1207
      %v1748 = vmul.f32 %v1747, %v1207
      %v1749 = vmul.f32 %v1748, %v1747
      %v1750 = vmul.f32 0.5, %v1749
      %v1751 = vsub.f32 1.5, %v1750
      %v1752 = vmul.f32 %v1747, %v1751
      %vm1753 = vweird.f32 %v1207
      %vm1754 = vweird.f32 %v1747
      %vm1755 = vmor %vm1753, %vm1754
      %v1756 = vsel %vm1755, %v1747, %v1752
      %v1757 = vrsqrt.pop %v1208
      %v1758 = vmul.f32 %v1757, %v1208
      %v1759 = vmul.f32 %v1758, %v1757
      %v1760 = vmul.f32 0.5, %v1759
      %v1761 = vsub.f32 1.5, %v1760
      %v1762 = vmul.f32 %v1757, %v1761
      %vm1763 = vweird.f32 %v1208
      %vm1764 = vweird.f32 %v1757
      %vm1765 = vmor %vm1763, %vm1764
      %v1766 = vsel %vm1765, %v1757, %v1762
      %v1767 = vrsqrt.pop %v1209
      %v1768 = vmul.f32 %v1767, %v1209
      %v1769 = vmul.f32 %v1768, %v1767
      %v1770 = vmul.f32 0.5, %v1769
      %v1771 = vsub.f32 1.5, %v1770
      %v1772 = vmul.f32 %v1767, %v1771
      %vm1773 = vweird.f32 %v1209
      %vm1774 = vweird.f32 %v1767
      %vm1775 = vmor %vm1773, %vm1774
      %v1776 = vsel %vm1775, %v1767, %v1772
      %v1777 = vrsqrt.pop %v1210
      %v1778 = vmul.f32 %v1777, %v1210
      %v1779 = vmul.f32 %v1778, %v1777
      %v1780 = vmul.f32 0.5, %v1779
      %v1781 = vsub.f32 1.5, %v1780
      %v1782 = vmul.f32 %v1777, %v1781
      %vm1783 = vweird.f32 %v1210
      %vm1784 = vweird.f32 %v1777
      %vm1785 = vmor %vm1783, %vm1784
      %v1786 = vsel %vm1785, %v1777, %v1782
      %v1787 = vrsqrt.pop %v1211
      %v1788 = vmul.f32 %v1787, %v1211
      %v1789 = vmul.f32 %v1788, %v1787
      %v1790 = vmul.f32 0.5, %v1789
      %v1791 = vsub.f32 1.5, %v1790
      %v1792 = vmul.f32 %v1787, %v1791
      %vm1793 = vweird.f32 %v1211
      %vm1794 = vweird.f32 %v1787
      %vm1795 = vmor %vm1793, %vm1794
      %v1796 = vsel %vm1795, %v1787, %v1792
      %v1797 = vrsqrt.pop %v1212
      %v1798 = vmul.f32 %v1797, %v1212
      %v1799 = vmul.f32 %v1798, %v1797
      %v1800 = vmul.f32 0.5, %v1799
      %v1801 = vsub.f32 1.5, %v1800
      %v1802 = vmul.f32 %v1797, %v1801
      %vm1803 = vweird.f32 %v1212
      %vm1804 = vweird.f32 %v1797
      %vm1805 = vmor %vm1803, %vm1804
      %v1806 = vsel %vm1805, %v1797, %v1802
      %v1807 = vrsqrt.pop %v1213
      %v1808 = vmul.f32 %v1807, %v1213
      %v1809 = vmul.f32 %v1808, %v1807
      %v1810 = vmul.f32 0.5, %v1809
      %v1811 = vsub.f32 1.5, %v1810
      %v1812 = vmul.f32 %v1807, %v1811
      %vm1813 = vweird.f32 %v1213
      %vm1814 = vweird.f32 %v1807
      %vm1815 = vmor %vm1813, %vm1814
      %v1816 = vsel %vm1815, %v1807, %v1812
      %v1817 = vrsqrt.pop %v1214
      %v1818 = vmul.f32 %v1817, %v1214
      %v1819 = vmul.f32 %v1818, %v1817
      %v1820 = vmul.f32 0.5, %v1819
      %v1821 = vsub.f32 1.5, %v1820
      %v1822 = vmul.f32 %v1817, %v1821
      %vm1823 = vweird.f32 %v1214
      %vm1824 = vweird.f32 %v1817
      %vm1825 = vmor %vm1823, %vm1824
      %v1826 = vsel %vm1825, %v1817, %v1822
      %v1827 = vrsqrt.pop %v1215
      %v1828 = vmul.f32 %v1827, %v1215
      %v1829 = vmul.f32 %v1828, %v1827
      %v1830 = vmul.f32 0.5, %v1829
      %v1831 = vsub.f32 1.5, %v1830
      %v1832 = vmul.f32 %v1827, %v1831
      %vm1833 = vweird.f32 %v1215
      %vm1834 = vweird.f32 %v1827
      %vm1835 = vmor %vm1833, %vm1834
      %v1836 = vsel %vm1835, %v1827, %v1832
      %v1837 = vrsqrt.pop %v1216
      %v1838 = vmul.f32 %v1837, %v1216
      %v1839 = vmul.f32 %v1838, %v1837
      %v1840 = vmul.f32 0.5, %v1839
      %v1841 = vsub.f32 1.5, %v1840
      %v1842 = vmul.f32 %v1837, %v1841
      %vm1843 = vweird.f32 %v1216
      %vm1844 = vweird.f32 %v1837
      %vm1845 = vmor %vm1843, %vm1844
      %v1846 = vsel %vm1845, %v1837, %v1842
      %v1847 = vrsqrt.pop %v1217
      %v1848 = vmul.f32 %v1847, %v1217
      %v1849 = vmul.f32 %v1848, %v1847
      %v1850 = vmul.f32 0.5, %v1849
      %v1851 = vsub.f32 1.5, %v1850
      %v1852 = vmul.f32 %v1847, %v1851
      %vm1853 = vweird.f32 %v1217
      %vm1854 = vweird.f32 %v1847
      %vm1855 = vmor %vm1853, %vm1854
      %v1856 = vsel %vm1855, %v1847, %v1852
      %v1857 = vrsqrt.pop %v1218
      %v1858 = vmul.f32 %v1857, %v1218
      %v1859 = vmul.f32 %v1858, %v1857
      %v1860 = vmul.f32 0.5, %v1859
      %v1861 = vsub.f32 1.5, %v1860
      %v1862 = vmul.f32 %v1857, %v1861
      %vm1863 = vweird.f32 %v1218
      %vm1864 = vweird.f32 %v1857
      %vm1865 = vmor %vm1863, %vm1864
      %v1866 = vsel %vm1865, %v1857, %v1862
      %v1867 = vrsqrt.pop %v1219
      %v1868 = vmul.f32 %v1867, %v1219
      %v1869 = vmul.f32 %v1868, %v1867
      %v1870 = vmul.f32 0.5, %v1869
      %v1871 = vsub.f32 1.5, %v1870
      %v1872 = vmul.f32 %v1867, %v1871
      %vm1873 = vweird.f32 %v1219
      %vm1874 = vweird.f32 %v1867
      %vm1875 = vmor %vm1873, %vm1874
      %v1876 = vsel %vm1875, %v1867, %v1872
      %v1877 = vrsqrt.pop %v1220
      %v1878 = vmul.f32 %v1877, %v1220
      %v1879 = vmul.f32 %v1878, %v1877
      %v1880 = vmul.f32 0.5, %v1879
      %v1881 = vsub.f32 1.5, %v1880
      %v1882 = vmul.f32 %v1877, %v1881
      %vm1883 = vweird.f32 %v1220
      %vm1884 = vweird.f32 %v1877
      %vm1885 = vmor %vm1883, %vm1884
      %v1886 = vsel %vm1885, %v1877, %v1882
      %v1887 = vrsqrt.pop %v1221
      %v1888 = vmul.f32 %v1887, %v1221
      %v1889 = vmul.f32 %v1888, %v1887
      %v1890 = vmul.f32 0.5, %v1889
      %v1891 = vsub.f32 1.5, %v1890
      %v1892 = vmul.f32 %v1887, %v1891
      %vm1893 = vweird.f32 %v1221
      %vm1894 = vweird.f32 %v1887
      %vm1895 = vmor %vm1893, %vm1894
      %v1896 = vsel %vm1895, %v1887, %v1892
      %v1897 = vrsqrt.pop %v1222
      %v1898 = vmul.f32 %v1897, %v1222
      %v1899 = vmul.f32 %v1898, %v1897
      %v1900 = vmul.f32 0.5, %v1899
      %v1901 = vsub.f32 1.5, %v1900
      %v1902 = vmul.f32 %v1897, %v1901
      %vm1903 = vweird.f32 %v1222
      %vm1904 = vweird.f32 %v1897
      %vm1905 = vmor %vm1903, %vm1904
      %v1906 = vsel %vm1905, %v1897, %v1902
      %v1907 = vrsqrt.pop %v1223
      %v1908 = vmul.f32 %v1907, %v1223
      %v1909 = vmul.f32 %v1908, %v1907
      %v1910 = vmul.f32 0.5, %v1909
      %v1911 = vsub.f32 1.5, %v1910
      %v1912 = vmul.f32 %v1907, %v1911
      %vm1913 = vweird.f32 %v1223
      %vm1914 = vweird.f32 %v1907
      %vm1915 = vmor %vm1913, %vm1914
      %v1916 = vsel %vm1915, %v1907, %v1912
      %v1917 = vrsqrt.pop %v1224
      %v1918 = vmul.f32 %v1917, %v1224
      %v1919 = vmul.f32 %v1918, %v1917
      %v1920 = vmul.f32 0.5, %v1919
      %v1921 = vsub.f32 1.5, %v1920
      %v1922 = vmul.f32 %v1917, %v1921
      %vm1923 = vweird.f32 %v1224
      %vm1924 = vweird.f32 %v1917
      %vm1925 = vmor %vm1923, %vm1924
      %v1926 = vsel %vm1925, %v1917, %v1922
      %v1927 = vrsqrt.pop %v1225
      %v1928 = vmul.f32 %v1927, %v1225
      %v1929 = vmul.f32 %v1928, %v1927
      %v1930 = vmul.f32 0.5, %v1929
      %v1931 = vsub.f32 1.5, %v1930
      %v1932 = vmul.f32 %v1927, %v1931
      %vm1933 = vweird.f32 %v1225
      %vm1934 = vweird.f32 %v1927
      %vm1935 = vmor %vm1933, %vm1934
      %v1936 = vsel %vm1935, %v1927, %v1932
      %v1937 = vrsqrt.pop %v1226
      %v1938 = vmul.f32 %v1937, %v1226
      %v1939 = vmul.f32 %v1938, %v1937
      %v1940 = vmul.f32 0.5, %v1939
      %v1941 = vsub.f32 1.5, %v1940
      %v1942 = vmul.f32 %v1937, %v1941
      %vm1943 = vweird.f32 %v1226
      %vm1944 = vweird.f32 %v1937
      %vm1945 = vmor %vm1943, %vm1944
      %v1946 = vsel %vm1945, %v1937, %v1942
      %v1947 = vld [vmem:[%s204] sm:$0xff]
      %v1948 = vld [vmem:[%s204 + $0x8] sm:$0xff]
      %v1949 = vld [vmem:[%s204 + $0x10] sm:$0xff]
      %v1950 = vld [vmem:[%s204 + $0x18] sm:$0xff]
      %v1951 = vld [vmem:[%s204 + $0x20] sm:$0xff]
      %v1952 = vld [vmem:[%s204 + $0x28] sm:$0xff]
      %v1953 = vld [vmem:[%s204 + $0x30] sm:$0xff]
      %v1954 = vld [vmem:[%s204 + $0x38] sm:$0xff]
      %v1955 = vld [vmem:[%s204 + $0x40] sm:$0xff]
      %v1956 = vld [vmem:[%s204 + $0x48] sm:$0xff]
      %v1957 = vld [vmem:[%s204 + $0x50] sm:$0xff]
      %v1958 = vld [vmem:[%s204 + $0x58] sm:$0xff]
      %v1959 = vld [vmem:[%s204 + $0x60] sm:$0xff]
      %v1960 = vld [vmem:[%s204 + $0x68] sm:$0xff]
      %v1961 = vld [vmem:[%s204 + $0x70] sm:$0xff]
      %v1962 = vld [vmem:[%s204 + $0x78] sm:$0xff]
      %v1963 = vld [vmem:[%s204 + $0x80] sm:$0xff]
      %v1964 = vld [vmem:[%s204 + $0x88] sm:$0xff]
      %v1965 = vld [vmem:[%s204 + $0x90] sm:$0xff]
      %v1966 = vld [vmem:[%s204 + $0x98] sm:$0xff]
      %v1967 = vld [vmem:[%s204 + $0xa0] sm:$0xff]
      %v1968 = vld [vmem:[%s204 + $0xa8] sm:$0xff]
      %v1969 = vld [vmem:[%s204 + $0xb0] sm:$0xff]
      %v1970 = vld [vmem:[%s204 + $0xb8] sm:$0xff]
      %v1971 = vld [vmem:[%s204 + $0xc0] sm:$0xff]
      %v1972 = vld [vmem:[%s204 + $0xc8] sm:$0xff]
      %v1973 = vld [vmem:[%s204 + $0xd0] sm:$0xff]
      %v1974 = vld [vmem:[%s204 + $0xd8] sm:$0xff]
      %v1975 = vld [vmem:[%s204 + $0xe0] sm:$0xff]
      %v1976 = vld [vmem:[%s204 + $0xe8] sm:$0xff]
      %v1977 = vld [vmem:[%s204 + $0xf0] sm:$0xff]
      %v1978 = vld [vmem:[%s204 + $0xf8] sm:$0xff]
      %v1979 = vld [vmem:[%s204 + $0x100] sm:$0xff]
      %v1980 = vld [vmem:[%s204 + $0x108] sm:$0xff]
      %v1981 = vld [vmem:[%s204 + $0x110] sm:$0xff]
      %v1982 = vld [vmem:[%s204 + $0x118] sm:$0xff]
      %v1983 = vld [vmem:[%s204 + $0x120] sm:$0xff]
      %v1984 = vld [vmem:[%s204 + $0x128] sm:$0xff]
      %v1985 = vld [vmem:[%s204 + $0x130] sm:$0xff]
      %v1986 = vld [vmem:[%s204 + $0x138] sm:$0xff]
      %v1987 = vld [vmem:[%s204 + $0x140] sm:$0xff]
      %v1988 = vld [vmem:[%s204 + $0x148] sm:$0xff]
      %v1989 = vld [vmem:[%s204 + $0x150] sm:$0xff]
      %v1990 = vld [vmem:[%s204 + $0x158] sm:$0xff]
      %v1991 = vld [vmem:[%s204 + $0x160] sm:$0xff]
      %v1992 = vld [vmem:[%s204 + $0x168] sm:$0xff]
      %v1993 = vld [vmem:[%s204 + $0x170] sm:$0xff]
      %v1994 = vld [vmem:[%s204 + $0x178] sm:$0xff]
      %v1995 = vld [vmem:[%s204 + $0x180] sm:$0xff]
      %v1996 = vld [vmem:[%s204 + $0x188] sm:$0xff]
      %v1997 = vld [vmem:[%s204 + $0x190] sm:$0xff]
      %v1998 = vld [vmem:[%s204 + $0x198] sm:$0xff]
      %v1999 = vld [vmem:[%s204 + $0x1a0] sm:$0xff]
      %v2000 = vld [vmem:[%s204 + $0x1a8] sm:$0xff]
      %v2001 = vld [vmem:[%s204 + $0x1b0] sm:$0xff]
      %v2002 = vld [vmem:[%s204 + $0x1b8] sm:$0xff]
      %v2003 = vld [vmem:[%s204 + $0x1c0] sm:$0xff]
      %v2004 = vld [vmem:[%s204 + $0x1c8] sm:$0xff]
      %v2005 = vld [vmem:[%s204 + $0x1d0] sm:$0xff]
      %v2006 = vld [vmem:[%s204 + $0x1d8] sm:$0xff]
      %v2007 = vld [vmem:[%s204 + $0x1e0] sm:$0xff]
      %v2008 = vld [vmem:[%s204 + $0x1e8] sm:$0xff]
      %v2009 = vld [vmem:[%s204 + $0x1f0] sm:$0xff]
      %v2010 = vld [vmem:[%s204 + $0x1f8] sm:$0xff]
      %v2011 = vld [vmem:[%s204 + $0x200] sm:$0xff]
      %v2012 = vld [vmem:[%s204 + $0x208] sm:$0xff]
      %v2013 = vld [vmem:[%s204 + $0x210] sm:$0xff]
      %v2014 = vld [vmem:[%s204 + $0x218] sm:$0xff]
      %v2015 = vld [vmem:[%s204 + $0x220] sm:$0xff]
      %v2016 = vld [vmem:[%s204 + $0x228] sm:$0xff]
      %v2017 = vld [vmem:[%s204 + $0x230] sm:$0xff]
      %v2018 = vld [vmem:[%s204 + $0x238] sm:$0xff]
      %v2019 = vmul.f32 %v1947, %v1236
      %v2020 = vmul.f32 %v1948, %v1246
      %v2021 = vmul.f32 %v1949, %v1256
      %v2022 = vmul.f32 %v1950, %v1266
      %v2023 = vmul.f32 %v1951, %v1276
      %v2024 = vmul.f32 %v1952, %v1286
      %v2025 = vmul.f32 %v1953, %v1296
      %v2026 = vmul.f32 %v1954, %v1306
      %v2027 = vmul.f32 %v1955, %v1316
      %v2028 = vmul.f32 %v1956, %v1326
      %v2029 = vmul.f32 %v1957, %v1336
      %v2030 = vmul.f32 %v1958, %v1346
      %v2031 = vmul.f32 %v1959, %v1356
      %v2032 = vmul.f32 %v1960, %v1366
      %v2033 = vmul.f32 %v1961, %v1376
      %v2034 = vmul.f32 %v1962, %v1386
      %v2035 = vmul.f32 %v1963, %v1396
      %v2036 = vmul.f32 %v1964, %v1406
      %v2037 = vmul.f32 %v1965, %v1416
      %v2038 = vmul.f32 %v1966, %v1426
      %v2039 = vmul.f32 %v1967, %v1436
      %v2040 = vmul.f32 %v1968, %v1446
      %v2041 = vmul.f32 %v1969, %v1456
      %v2042 = vmul.f32 %v1970, %v1466
      %v2043 = vmul.f32 %v1971, %v1476
      %v2044 = vmul.f32 %v1972, %v1486
      %v2045 = vmul.f32 %v1973, %v1496
      %v2046 = vmul.f32 %v1974, %v1506
      %v2047 = vmul.f32 %v1975, %v1516
      %v2048 = vmul.f32 %v1976, %v1526
      %v2049 = vmul.f32 %v1977, %v1536
      %v2050 = vmul.f32 %v1978, %v1546
      %v2051 = vmul.f32 %v1979, %v1556
      %v2052 = vmul.f32 %v1980, %v1566
      %v2053 = vmul.f32 %v1981, %v1576
      %v2054 = vmul.f32 %v1982, %v1586
      %v2055 = vmul.f32 %v1983, %v1596
      %v2056 = vmul.f32 %v1984, %v1606
      %v2057 = vmul.f32 %v1985, %v1616
      %v2058 = vmul.f32 %v1986, %v1626
      %v2059 = vmul.f32 %v1987, %v1636
      %v2060 = vmul.f32 %v1988, %v1646
      %v2061 = vmul.f32 %v1989, %v1656
      %v2062 = vmul.f32 %v1990, %v1666
      %v2063 = vmul.f32 %v1991, %v1676
      %v2064 = vmul.f32 %v1992, %v1686
      %v2065 = vmul.f32 %v1993, %v1696
      %v2066 = vmul.f32 %v1994, %v1706
      %v2067 = vmul.f32 %v1995, %v1716
      %v2068 = vmul.f32 %v1996, %v1726
      %v2069 = vmul.f32 %v1997, %v1736
      %v2070 = vmul.f32 %v1998, %v1746
      %v2071 = vmul.f32 %v1999, %v1756
      %v2072 = vmul.f32 %v2000, %v1766
      %v2073 = vmul.f32 %v2001, %v1776
      %v2074 = vmul.f32 %v2002, %v1786
      %v2075 = vmul.f32 %v2003, %v1796
      %v2076 = vmul.f32 %v2004, %v1806
      %v2077 = vmul.f32 %v2005, %v1816
      %v2078 = vmul.f32 %v2006, %v1826
      %v2079 = vmul.f32 %v2007, %v1836
      %v2080 = vmul.f32 %v2008, %v1846
      %v2081 = vmul.f32 %v2009, %v1856
      %v2082 = vmul.f32 %v2010, %v1866
      %v2083 = vmul.f32 %v2011, %v1876
      %v2084 = vmul.f32 %v2012, %v1886
      %v2085 = vmul.f32 %v2013, %v1896
      %v2086 = vmul.f32 %v2014, %v1906
      %v2087 = vmul.f32 %v2015, %v1916
      %v2088 = vmul.f32 %v2016, %v1926
      %v2089 = vmul.f32 %v2017, %v1936
      %v2090 = vmul.f32 %v2018, %v1946
      %v2091 = vld [vmem:[%s210] sm:$0xff]
      %v2092 = vld [vmem:[%s210 + $0x8] sm:$0xff]
      %v2093 = vld [vmem:[%s210 + $0x10] sm:$0xff]
      %v2094 = vld [vmem:[%s210 + $0x18] sm:$0xff]
      %v2095 = vld [vmem:[%s210 + $0x20] sm:$0xff]
      %v2096 = vld [vmem:[%s210 + $0x28] sm:$0xff]
      %v2097 = vld [vmem:[%s210 + $0x30] sm:$0xff]
      %v2098 = vld [vmem:[%s210 + $0x38] sm:$0xff]
      %v2099 = vld [vmem:[%s210 + $0x40] sm:$0xff]
      %v2100 = vld [vmem:[%s210 + $0x48] sm:$0xff]
      %v2101 = vld [vmem:[%s210 + $0x50] sm:$0xff]
      %v2102 = vld [vmem:[%s210 + $0x58] sm:$0xff]
      %v2103 = vld [vmem:[%s210 + $0x60] sm:$0xff]
      %v2104 = vld [vmem:[%s210 + $0x68] sm:$0xff]
      %v2105 = vld [vmem:[%s210 + $0x70] sm:$0xff]
      %v2106 = vld [vmem:[%s210 + $0x78] sm:$0xff]
      %v2107 = vld [vmem:[%s210 + $0x80] sm:$0xff]
      %v2108 = vld [vmem:[%s210 + $0x88] sm:$0xff]
      %v2109 = vld [vmem:[%s210 + $0x90] sm:$0xff]
      %v2110 = vld [vmem:[%s210 + $0x98] sm:$0xff]
      %v2111 = vld [vmem:[%s210 + $0xa0] sm:$0xff]
      %v2112 = vld [vmem:[%s210 + $0xa8] sm:$0xff]
      %v2113 = vld [vmem:[%s210 + $0xb0] sm:$0xff]
      %v2114 = vld [vmem:[%s210 + $0xb8] sm:$0xff]
      %v2115 = vld [vmem:[%s210 + $0xc0] sm:$0xff]
      %v2116 = vld [vmem:[%s210 + $0xc8] sm:$0xff]
      %v2117 = vld [vmem:[%s210 + $0xd0] sm:$0xff]
      %v2118 = vld [vmem:[%s210 + $0xd8] sm:$0xff]
      %v2119 = vld [vmem:[%s210 + $0xe0] sm:$0xff]
      %v2120 = vld [vmem:[%s210 + $0xe8] sm:$0xff]
      %v2121 = vld [vmem:[%s210 + $0xf0] sm:$0xff]
      %v2122 = vld [vmem:[%s210 + $0xf8] sm:$0xff]
      %v2123 = vld [vmem:[%s210 + $0x100] sm:$0xff]
      %v2124 = vld [vmem:[%s210 + $0x108] sm:$0xff]
      %v2125 = vld [vmem:[%s210 + $0x110] sm:$0xff]
      %v2126 = vld [vmem:[%s210 + $0x118] sm:$0xff]
      %v2127 = vld [vmem:[%s210 + $0x120] sm:$0xff]
      %v2128 = vld [vmem:[%s210 + $0x128] sm:$0xff]
      %v2129 = vld [vmem:[%s210 + $0x130] sm:$0xff]
      %v2130 = vld [vmem:[%s210 + $0x138] sm:$0xff]
      %v2131 = vld [vmem:[%s210 + $0x140] sm:$0xff]
      %v2132 = vld [vmem:[%s210 + $0x148] sm:$0xff]
      %v2133 = vld [vmem:[%s210 + $0x150] sm:$0xff]
      %v2134 = vld [vmem:[%s210 + $0x158] sm:$0xff]
      %v2135 = vld [vmem:[%s210 + $0x160] sm:$0xff]
      %v2136 = vld [vmem:[%s210 + $0x168] sm:$0xff]
      %v2137 = vld [vmem:[%s210 + $0x170] sm:$0xff]
      %v2138 = vld [vmem:[%s210 + $0x178] sm:$0xff]
      %v2139 = vld [vmem:[%s210 + $0x180] sm:$0xff]
      %v2140 = vld [vmem:[%s210 + $0x188] sm:$0xff]
      %v2141 = vld [vmem:[%s210 + $0x190] sm:$0xff]
      %v2142 = vld [vmem:[%s210 + $0x198] sm:$0xff]
      %v2143 = vld [vmem:[%s210 + $0x1a0] sm:$0xff]
      %v2144 = vld [vmem:[%s210 + $0x1a8] sm:$0xff]
      %v2145 = vld [vmem:[%s210 + $0x1b0] sm:$0xff]
      %v2146 = vld [vmem:[%s210 + $0x1b8] sm:$0xff]
      %v2147 = vld [vmem:[%s210 + $0x1c0] sm:$0xff]
      %v2148 = vld [vmem:[%s210 + $0x1c8] sm:$0xff]
      %v2149 = vld [vmem:[%s210 + $0x1d0] sm:$0xff]
      %v2150 = vld [vmem:[%s210 + $0x1d8] sm:$0xff]
      %v2151 = vld [vmem:[%s210 + $0x1e0] sm:$0xff]
      %v2152 = vld [vmem:[%s210 + $0x1e8] sm:$0xff]
      %v2153 = vld [vmem:[%s210 + $0x1f0] sm:$0xff]
      %v2154 = vld [vmem:[%s210 + $0x1f8] sm:$0xff]
      %v2155 = vld [vmem:[%s210 + $0x200] sm:$0xff]
      %v2156 = vld [vmem:[%s210 + $0x208] sm:$0xff]
      %v2157 = vld [vmem:[%s210 + $0x210] sm:$0xff]
      %v2158 = vld [vmem:[%s210 + $0x218] sm:$0xff]
      %v2159 = vld [vmem:[%s210 + $0x220] sm:$0xff]
      %v2160 = vld [vmem:[%s210 + $0x228] sm:$0xff]
      %v2161 = vld [vmem:[%s210 + $0x230] sm:$0xff]
      %v2162 = vld [vmem:[%s210 + $0x238] sm:$0xff]
      %v2163 = vmul.f32 %v795, %v2019
      %v2164 = vmul.f32 %v796, %v2020
      %v2165 = vmul.f32 %v797, %v2021
      %v2166 = vmul.f32 %v798, %v2022
      %v2167 = vmul.f32 %v799, %v2023
      %v2168 = vmul.f32 %v800, %v2024
      %v2169 = vmul.f32 %v801, %v2025
      %v2170 = vmul.f32 %v802, %v2026
      %v2171 = vmul.f32 %v803, %v2027
      %v2172 = vmul.f32 %v804, %v2028
      %v2173 = vmul.f32 %v805, %v2029
      %v2174 = vmul.f32 %v806, %v2030
      %v2175 = vmul.f32 %v807, %v2031
      %v2176 = vmul.f32 %v808, %v2032
      %v2177 = vmul.f32 %v809, %v2033
      %v2178 = vmul.f32 %v810, %v2034
      %v2179 = vmul.f32 %v811, %v2035
      %v2180 = vmul.f32 %v812, %v2036
      %v2181 = vmul.f32 %v813, %v2037
      %v2182 = vmul.f32 %v814, %v2038
      %v2183 = vmul.f32 %v815, %v2039
      %v2184 = vmul.f32 %v816, %v2040
      %v2185 = vmul.f32 %v817, %v2041
      %v2186 = vmul.f32 %v818, %v2042
      %v2187 = vmul.f32 %v819, %v2043
      %v2188 = vmul.f32 %v820, %v2044
      %v2189 = vmul.f32 %v821, %v2045
      %v2190 = vmul.f32 %v822, %v2046
      %v2191 = vmul.f32 %v823, %v2047
      %v2192 = vmul.f32 %v824, %v2048
      %v2193 = vmul.f32 %v825, %v2049
      %v2194 = vmul.f32 %v826, %v2050
      %v2195 = vmul.f32 %v827, %v2051
      %v2196 = vmul.f32 %v828, %v2052
      %v2197 = vmul.f32 %v829, %v2053
      %v2198 = vmul.f32 %v830, %v2054
      %v2199 = vmul.f32 %v831, %v2055
      %v2200 = vmul.f32 %v832, %v2056
      %v2201 = vmul.f32 %v833, %v2057
      %v2202 = vmul.f32 %v834, %v2058
      %v2203 = vmul.f32 %v835, %v2059
      %v2204 = vmul.f32 %v836, %v2060
      %v2205 = vmul.f32 %v837, %v2061
      %v2206 = vmul.f32 %v838, %v2062
      %v2207 = vmul.f32 %v839, %v2063
      %v2208 = vmul.f32 %v840, %v2064
      %v2209 = vmul.f32 %v841, %v2065
      %v2210 = vmul.f32 %v842, %v2066
      %v2211 = vmul.f32 %v843, %v2067
      %v2212 = vmul.f32 %v844, %v2068
      %v2213 = vmul.f32 %v845, %v2069
      %v2214 = vmul.f32 %v846, %v2070
      %v2215 = vmul.f32 %v847, %v2071
      %v2216 = vmul.f32 %v848, %v2072
      %v2217 = vmul.f32 %v849, %v2073
      %v2218 = vmul.f32 %v850, %v2074
      %v2219 = vmul.f32 %v851, %v2075
      %v2220 = vmul.f32 %v852, %v2076
      %v2221 = vmul.f32 %v853, %v2077
      %v2222 = vmul.f32 %v854, %v2078
      %v2223 = vmul.f32 %v855, %v2079
      %v2224 = vmul.f32 %v856, %v2080
      %v2225 = vmul.f32 %v857, %v2081
      %v2226 = vmul.f32 %v858, %v2082
      %v2227 = vmul.f32 %v859, %v2083
      %v2228 = vmul.f32 %v860, %v2084
      %v2229 = vmul.f32 %v861, %v2085
      %v2230 = vmul.f32 %v862, %v2086
      %v2231 = vmul.f32 %v863, %v2087
      %v2232 = vmul.f32 %v864, %v2088
      %v2233 = vmul.f32 %v865, %v2089
      %v2234 = vmul.f32 %v866, %v2090
      %v2235 = vsub.f32 %v2091, %v2163
      %v2236 = vsub.f32 %v2092, %v2164
      %v2237 = vsub.f32 %v2093, %v2165
      %v2238 = vsub.f32 %v2094, %v2166
      %v2239 = vsub.f32 %v2095, %v2167
      %v2240 = vsub.f32 %v2096, %v2168
      %v2241 = vsub.f32 %v2097, %v2169
      %v2242 = vsub.f32 %v2098, %v2170
      %v2243 = vsub.f32 %v2099, %v2171
      %v2244 = vsub.f32 %v2100, %v2172
      %v2245 = vsub.f32 %v2101, %v2173
      %v2246 = vsub.f32 %v2102, %v2174
      %v2247 = vsub.f32 %v2103, %v2175
      %v2248 = vsub.f32 %v2104, %v2176
      %v2249 = vsub.f32 %v2105, %v2177
      %v2250 = vsub.f32 %v2106, %v2178
      %v2251 = vsub.f32 %v2107, %v2179
      %v2252 = vsub.f32 %v2108, %v2180
      %v2253 = vsub.f32 %v2109, %v2181
      %v2254 = vsub.f32 %v2110, %v2182
      %v2255 = vsub.f32 %v2111, %v2183
      %v2256 = vsub.f32 %v2112, %v2184
      %v2257 = vsub.f32 %v2113, %v2185
      %v2258 = vsub.f32 %v2114, %v2186
      %v2259 = vsub.f32 %v2115, %v2187
      %v2260 = vsub.f32 %v2116, %v2188
      %v2261 = vsub.f32 %v2117, %v2189
      %v2262 = vsub.f32 %v2118, %v2190
      %v2263 = vsub.f32 %v2119, %v2191
      %v2264 = vsub.f32 %v2120, %v2192
      %v2265 = vsub.f32 %v2121, %v2193
      %v2266 = vsub.f32 %v2122, %v2194
      %v2267 = vsub.f32 %v2123, %v2195
      %v2268 = vsub.f32 %v2124, %v2196
      %v2269 = vsub.f32 %v2125, %v2197
      %v2270 = vsub.f32 %v2126, %v2198
      %v2271 = vsub.f32 %v2127, %v2199
      %v2272 = vsub.f32 %v2128, %v2200
      %v2273 = vsub.f32 %v2129, %v2201
      %v2274 = vsub.f32 %v2130, %v2202
      %v2275 = vsub.f32 %v2131, %v2203
      %v2276 = vsub.f32 %v2132, %v2204
      %v2277 = vsub.f32 %v2133, %v2205
      %v2278 = vsub.f32 %v2134, %v2206
      %v2279 = vsub.f32 %v2135, %v2207
      %v2280 = vsub.f32 %v2136, %v2208
      %v2281 = vsub.f32 %v2137, %v2209
      %v2282 = vsub.f32 %v2138, %v2210
      %v2283 = vsub.f32 %v2139, %v2211
      %v2284 = vsub.f32 %v2140, %v2212
      %v2285 = vsub.f32 %v2141, %v2213
      %v2286 = vsub.f32 %v2142, %v2214
      %v2287 = vsub.f32 %v2143, %v2215
      %v2288 = vsub.f32 %v2144, %v2216
      %v2289 = vsub.f32 %v2145, %v2217
      %v2290 = vsub.f32 %v2146, %v2218
      %v2291 = vsub.f32 %v2147, %v2219
      %v2292 = vsub.f32 %v2148, %v2220
      %v2293 = vsub.f32 %v2149, %v2221
      %v2294 = vsub.f32 %v2150, %v2222
      %v2295 = vsub.f32 %v2151, %v2223
      %v2296 = vsub.f32 %v2152, %v2224
      %v2297 = vsub.f32 %v2153, %v2225
      %v2298 = vsub.f32 %v2154, %v2226
      %v2299 = vsub.f32 %v2155, %v2227
      %v2300 = vsub.f32 %v2156, %v2228
      %v2301 = vsub.f32 %v2157, %v2229
      %v2302 = vsub.f32 %v2158, %v2230
      %v2303 = vsub.f32 %v2159, %v2231
      %v2304 = vsub.f32 %v2160, %v2232
      %v2305 = vsub.f32 %v2161, %v2233
      %v2306 = vsub.f32 %v2162, %v2234
      %2308 = vset.pattern.permute.xlu0 0
      %2309 = vperm.xlu0 %2308, %v2019
      %v2310 = vpop.permute.xlu0 %2309
      %2313 = vset.pattern.permute.xlu0 0
      %2314 = vperm.xlu0 %2313, %v2020
      %v2315 = vpop.permute.xlu0 %2314
      %2318 = vset.pattern.permute.xlu0 0
      %2319 = vperm.xlu0 %2318, %v2021
      %v2320 = vpop.permute.xlu0 %2319
      %2323 = vset.pattern.permute.xlu0 0
      %2324 = vperm.xlu0 %2323, %v2022
      %v2325 = vpop.permute.xlu0 %2324
      %2328 = vset.pattern.permute.xlu0 0
      %2329 = vperm.xlu0 %2328, %v2023
      %v2330 = vpop.permute.xlu0 %2329
      %2333 = vset.pattern.permute.xlu0 0
      %2334 = vperm.xlu0 %2333, %v2024
      %v2335 = vpop.permute.xlu0 %2334
      %2338 = vset.pattern.permute.xlu0 0
      %2339 = vperm.xlu0 %2338, %v2025
      %v2340 = vpop.permute.xlu0 %2339
      %2343 = vset.pattern.permute.xlu0 0
      %2344 = vperm.xlu0 %2343, %v2026
      %v2345 = vpop.permute.xlu0 %2344
      %2348 = vset.pattern.permute.xlu0 0
      %2349 = vperm.xlu0 %2348, %v2027
      %v2350 = vpop.permute.xlu0 %2349
      %2353 = vset.pattern.permute.xlu0 0
      %2354 = vperm.xlu0 %2353, %v2028
      %v2355 = vpop.permute.xlu0 %2354
      %2358 = vset.pattern.permute.xlu0 0
      %2359 = vperm.xlu0 %2358, %v2029
      %v2360 = vpop.permute.xlu0 %2359
      %2363 = vset.pattern.permute.xlu0 0
      %2364 = vperm.xlu0 %2363, %v2030
      %v2365 = vpop.permute.xlu0 %2364
      %2368 = vset.pattern.permute.xlu0 0
      %2369 = vperm.xlu0 %2368, %v2031
      %v2370 = vpop.permute.xlu0 %2369
      %2373 = vset.pattern.permute.xlu0 0
      %2374 = vperm.xlu0 %2373, %v2032
      %v2375 = vpop.permute.xlu0 %2374
      %2378 = vset.pattern.permute.xlu0 0
      %2379 = vperm.xlu0 %2378, %v2033
      %v2380 = vpop.permute.xlu0 %2379
      %2383 = vset.pattern.permute.xlu0 0
      %2384 = vperm.xlu0 %2383, %v2034
      %v2385 = vpop.permute.xlu0 %2384
      %2388 = vset.pattern.permute.xlu0 0
      %2389 = vperm.xlu0 %2388, %v2035
      %v2390 = vpop.permute.xlu0 %2389
      %2393 = vset.pattern.permute.xlu0 0
      %2394 = vperm.xlu0 %2393, %v2036
      %v2395 = vpop.permute.xlu0 %2394
      %2398 = vset.pattern.permute.xlu0 0
      %2399 = vperm.xlu0 %2398, %v2037
      %v2400 = vpop.permute.xlu0 %2399
      %2403 = vset.pattern.permute.xlu0 0
      %2404 = vperm.xlu0 %2403, %v2038
      %v2405 = vpop.permute.xlu0 %2404
      %2408 = vset.pattern.permute.xlu0 0
      %2409 = vperm.xlu0 %2408, %v2039
      %v2410 = vpop.permute.xlu0 %2409
      %2413 = vset.pattern.permute.xlu0 0
      %2414 = vperm.xlu0 %2413, %v2040
      %v2415 = vpop.permute.xlu0 %2414
      %2418 = vset.pattern.permute.xlu0 0
      %2419 = vperm.xlu0 %2418, %v2041
      %v2420 = vpop.permute.xlu0 %2419
      %2423 = vset.pattern.permute.xlu0 0
      %2424 = vperm.xlu0 %2423, %v2042
      %v2425 = vpop.permute.xlu0 %2424
      %2428 = vset.pattern.permute.xlu0 0
      %2429 = vperm.xlu0 %2428, %v2043
      %v2430 = vpop.permute.xlu0 %2429
      %2433 = vset.pattern.permute.xlu0 0
      %2434 = vperm.xlu0 %2433, %v2044
      %v2435 = vpop.permute.xlu0 %2434
      %2438 = vset.pattern.permute.xlu0 0
      %2439 = vperm.xlu0 %2438, %v2045
      %v2440 = vpop.permute.xlu0 %2439
      %2443 = vset.pattern.permute.xlu0 0
      %2444 = vperm.xlu0 %2443, %v2046
      %v2445 = vpop.permute.xlu0 %2444
      %2448 = vset.pattern.permute.xlu0 0
      %2449 = vperm.xlu0 %2448, %v2047
      %v2450 = vpop.permute.xlu0 %2449
      %2453 = vset.pattern.permute.xlu0 0
      %2454 = vperm.xlu0 %2453, %v2048
      %v2455 = vpop.permute.xlu0 %2454
      %2458 = vset.pattern.permute.xlu0 0
      %2459 = vperm.xlu0 %2458, %v2049
      %v2460 = vpop.permute.xlu0 %2459
      %2463 = vset.pattern.permute.xlu0 0
      %2464 = vperm.xlu0 %2463, %v2050
      %v2465 = vpop.permute.xlu0 %2464
      %2468 = vset.pattern.permute.xlu0 0
      %2469 = vperm.xlu0 %2468, %v2051
      %v2470 = vpop.permute.xlu0 %2469
      %2473 = vset.pattern.permute.xlu0 0
      %2474 = vperm.xlu0 %2473, %v2052
      %v2475 = vpop.permute.xlu0 %2474
      %2478 = vset.pattern.permute.xlu0 0
      %2479 = vperm.xlu0 %2478, %v2053
      %v2480 = vpop.permute.xlu0 %2479
      %2483 = vset.pattern.permute.xlu0 0
      %2484 = vperm.xlu0 %2483, %v2054
      %v2485 = vpop.permute.xlu0 %2484
      %2488 = vset.pattern.permute.xlu0 0
      %2489 = vperm.xlu0 %2488, %v2055
      %v2490 = vpop.permute.xlu0 %2489
      %2493 = vset.pattern.permute.xlu0 0
      %2494 = vperm.xlu0 %2493, %v2056
      %v2495 = vpop.permute.xlu0 %2494
      %2498 = vset.pattern.permute.xlu0 0
      %2499 = vperm.xlu0 %2498, %v2057
      %v2500 = vpop.permute.xlu0 %2499
      %2503 = vset.pattern.permute.xlu0 0
      %2504 = vperm.xlu0 %2503, %v2058
      %v2505 = vpop.permute.xlu0 %2504
      %2508 = vset.pattern.permute.xlu0 0
      %2509 = vperm.xlu0 %2508, %v2059
      %v2510 = vpop.permute.xlu0 %2509
      %2513 = vset.pattern.permute.xlu0 0
      %2514 = vperm.xlu0 %2513, %v2060
      %v2515 = vpop.permute.xlu0 %2514
      %2518 = vset.pattern.permute.xlu0 0
      %2519 = vperm.xlu0 %2518, %v2061
      %v2520 = vpop.permute.xlu0 %2519
      %2523 = vset.pattern.permute.xlu0 0
      %2524 = vperm.xlu0 %2523, %v2062
      %v2525 = vpop.permute.xlu0 %2524
      %2528 = vset.pattern.permute.xlu0 0
      %2529 = vperm.xlu0 %2528, %v2063
      %v2530 = vpop.permute.xlu0 %2529
      %2533 = vset.pattern.permute.xlu0 0
      %2534 = vperm.xlu0 %2533, %v2064
      %v2535 = vpop.permute.xlu0 %2534
      %2538 = vset.pattern.permute.xlu0 0
      %2539 = vperm.xlu0 %2538, %v2065
      %v2540 = vpop.permute.xlu0 %2539
      %2543 = vset.pattern.permute.xlu0 0
      %2544 = vperm.xlu0 %2543, %v2066
      %v2545 = vpop.permute.xlu0 %2544
      %2548 = vset.pattern.permute.xlu0 0
      %2549 = vperm.xlu0 %2548, %v2067
      %v2550 = vpop.permute.xlu0 %2549
      %2553 = vset.pattern.permute.xlu0 0
      %2554 = vperm.xlu0 %2553, %v2068
      %v2555 = vpop.permute.xlu0 %2554
      %2558 = vset.pattern.permute.xlu0 0
      %2559 = vperm.xlu0 %2558, %v2069
      %v2560 = vpop.permute.xlu0 %2559
      %2563 = vset.pattern.permute.xlu0 0
      %2564 = vperm.xlu0 %2563, %v2070
      %v2565 = vpop.permute.xlu0 %2564
      %2568 = vset.pattern.permute.xlu0 0
      %2569 = vperm.xlu0 %2568, %v2071
      %v2570 = vpop.permute.xlu0 %2569
      %2573 = vset.pattern.permute.xlu0 0
      %2574 = vperm.xlu0 %2573, %v2072
      %v2575 = vpop.permute.xlu0 %2574
      %2578 = vset.pattern.permute.xlu0 0
      %2579 = vperm.xlu0 %2578, %v2073
      %v2580 = vpop.permute.xlu0 %2579
      %2583 = vset.pattern.permute.xlu0 0
      %2584 = vperm.xlu0 %2583, %v2074
      %v2585 = vpop.permute.xlu0 %2584
      %2588 = vset.pattern.permute.xlu0 0
      %2589 = vperm.xlu0 %2588, %v2075
      %v2590 = vpop.permute.xlu0 %2589
      %2593 = vset.pattern.permute.xlu0 0
      %2594 = vperm.xlu0 %2593, %v2076
      %v2595 = vpop.permute.xlu0 %2594
      %2598 = vset.pattern.permute.xlu0 0
      %2599 = vperm.xlu0 %2598, %v2077
      %v2600 = vpop.permute.xlu0 %2599
      %2603 = vset.pattern.permute.xlu0 0
      %2604 = vperm.xlu0 %2603, %v2078
      %v2605 = vpop.permute.xlu0 %2604
      %2608 = vset.pattern.permute.xlu0 0
      %2609 = vperm.xlu0 %2608, %v2079
      %v2610 = vpop.permute.xlu0 %2609
      %2613 = vset.pattern.permute.xlu0 0
      %2614 = vperm.xlu0 %2613, %v2080
      %v2615 = vpop.permute.xlu0 %2614
      %2618 = vset.pattern.permute.xlu0 0
      %2619 = vperm.xlu0 %2618, %v2081
      %v2620 = vpop.permute.xlu0 %2619
      %2623 = vset.pattern.permute.xlu0 0
      %2624 = vperm.xlu0 %2623, %v2082
      %v2625 = vpop.permute.xlu0 %2624
      %2628 = vset.pattern.permute.xlu0 0
      %2629 = vperm.xlu0 %2628, %v2083
      %v2630 = vpop.permute.xlu0 %2629
      %2633 = vset.pattern.permute.xlu0 0
      %2634 = vperm.xlu0 %2633, %v2084
      %v2635 = vpop.permute.xlu0 %2634
      %2638 = vset.pattern.permute.xlu0 0
      %2639 = vperm.xlu0 %2638, %v2085
      %v2640 = vpop.permute.xlu0 %2639
      %2643 = vset.pattern.permute.xlu0 0
      %2644 = vperm.xlu0 %2643, %v2086
      %v2645 = vpop.permute.xlu0 %2644
      %2648 = vset.pattern.permute.xlu0 0
      %2649 = vperm.xlu0 %2648, %v2087
      %v2650 = vpop.permute.xlu0 %2649
      %2653 = vset.pattern.permute.xlu0 0
      %2654 = vperm.xlu0 %2653, %v2088
      %v2655 = vpop.permute.xlu0 %2654
      %2658 = vset.pattern.permute.xlu0 0
      %2659 = vperm.xlu0 %2658, %v2089
      %v2660 = vpop.permute.xlu0 %2659
      %2663 = vset.pattern.permute.xlu0 0
      %2664 = vperm.xlu0 %2663, %v2090
      %v2665 = vpop.permute.xlu0 %2664
      %v2667 = vmul.f32 %v218, %v2310
      %v2668 = vmul.f32 %v219, %v2315
      %v2669 = vmul.f32 %v220, %v2320
      %v2670 = vmul.f32 %v221, %v2325
      %v2671 = vmul.f32 %v222, %v2330
      %v2672 = vmul.f32 %v223, %v2335
      %v2673 = vmul.f32 %v224, %v2340
      %v2674 = vmul.f32 %v225, %v2345
      %v2675 = vmul.f32 %v226, %v2350
      %v2676 = vmul.f32 %v227, %v2355
      %v2677 = vmul.f32 %v228, %v2360
      %v2678 = vmul.f32 %v229, %v2365
      %v2679 = vmul.f32 %v230, %v2370
      %v2680 = vmul.f32 %v231, %v2375
      %v2681 = vmul.f32 %v232, %v2380
      %v2682 = vmul.f32 %v233, %v2385
      %v2683 = vmul.f32 %v234, %v2390
      %v2684 = vmul.f32 %v235, %v2395
      %v2685 = vmul.f32 %v236, %v2400
      %v2686 = vmul.f32 %v237, %v2405
      %v2687 = vmul.f32 %v238, %v2410
      %v2688 = vmul.f32 %v239, %v2415
      %v2689 = vmul.f32 %v240, %v2420
      %v2690 = vmul.f32 %v241, %v2425
      %v2691 = vmul.f32 %v242, %v2430
      %v2692 = vmul.f32 %v243, %v2435
      %v2693 = vmul.f32 %v244, %v2440
      %v2694 = vmul.f32 %v245, %v2445
      %v2695 = vmul.f32 %v246, %v2450
      %v2696 = vmul.f32 %v247, %v2455
      %v2697 = vmul.f32 %v248, %v2460
      %v2698 = vmul.f32 %v249, %v2465
      %v2699 = vmul.f32 %v250, %v2470
      %v2700 = vmul.f32 %v251, %v2475
      %v2701 = vmul.f32 %v252, %v2480
      %v2702 = vmul.f32 %v253, %v2485
      %v2703 = vmul.f32 %v254, %v2490
      %v2704 = vmul.f32 %v255, %v2495
      %v2705 = vmul.f32 %v256, %v2500
      %v2706 = vmul.f32 %v257, %v2505
      %v2707 = vmul.f32 %v258, %v2510
      %v2708 = vmul.f32 %v259, %v2515
      %v2709 = vmul.f32 %v260, %v2520
      %v2710 = vmul.f32 %v261, %v2525
      %v2711 = vmul.f32 %v262, %v2530
      %v2712 = vmul.f32 %v263, %v2535
      %v2713 = vmul.f32 %v264, %v2540
      %v2714 = vmul.f32 %v265, %v2545
      %v2715 = vmul.f32 %v266, %v2550
      %v2716 = vmul.f32 %v267, %v2555
      %v2717 = vmul.f32 %v268, %v2560
      %v2718 = vmul.f32 %v269, %v2565
      %v2719 = vmul.f32 %v270, %v2570
      %v2720 = vmul.f32 %v271, %v2575
      %v2721 = vmul.f32 %v272, %v2580
      %v2722 = vmul.f32 %v273, %v2585
      %v2723 = vmul.f32 %v274, %v2590
      %v2724 = vmul.f32 %v275, %v2595
      %v2725 = vmul.f32 %v276, %v2600
      %v2726 = vmul.f32 %v277, %v2605
      %v2727 = vmul.f32 %v278, %v2610
      %v2728 = vmul.f32 %v279, %v2615
      %v2729 = vmul.f32 %v280, %v2620
      %v2730 = vmul.f32 %v281, %v2625
      %v2731 = vmul.f32 %v282, %v2630
      %v2732 = vmul.f32 %v283, %v2635
      %v2733 = vmul.f32 %v284, %v2640
      %v2734 = vmul.f32 %v285, %v2645
      %v2735 = vmul.f32 %v286, %v2650
      %v2736 = vmul.f32 %v287, %v2655
      %v2737 = vmul.f32 %v288, %v2660
      %v2738 = vmul.f32 %v289, %v2665
      %2740 = vset.pattern.permute.xlu0 0
      %2741 = vperm.xlu0 %2740, %v2235
      %v2742 = vpop.permute.xlu0 %2741
      %2745 = vset.pattern.permute.xlu0 0
      %2746 = vperm.xlu0 %2745, %v2236
      %v2747 = vpop.permute.xlu0 %2746
      %2750 = vset.pattern.permute.xlu0 0
      %2751 = vperm.xlu0 %2750, %v2237
      %v2752 = vpop.permute.xlu0 %2751
      %2755 = vset.pattern.permute.xlu0 0
      %2756 = vperm.xlu0 %2755, %v2238
      %v2757 = vpop.permute.xlu0 %2756
      %2760 = vset.pattern.permute.xlu0 0
      %2761 = vperm.xlu0 %2760, %v2239
      %v2762 = vpop.permute.xlu0 %2761
      %2765 = vset.pattern.permute.xlu0 0
      %2766 = vperm.xlu0 %2765, %v2240
      %v2767 = vpop.permute.xlu0 %2766
      %2770 = vset.pattern.permute.xlu0 0
      %2771 = vperm.xlu0 %2770, %v2241
      %v2772 = vpop.permute.xlu0 %2771
      %2775 = vset.pattern.permute.xlu0 0
      %2776 = vperm.xlu0 %2775, %v2242
      %v2777 = vpop.permute.xlu0 %2776
      %2780 = vset.pattern.permute.xlu0 0
      %2781 = vperm.xlu0 %2780, %v2243
      %v2782 = vpop.permute.xlu0 %2781
      %2785 = vset.pattern.permute.xlu0 0
      %2786 = vperm.xlu0 %2785, %v2244
      %v2787 = vpop.permute.xlu0 %2786
      %2790 = vset.pattern.permute.xlu0 0
      %2791 = vperm.xlu0 %2790, %v2245
      %v2792 = vpop.permute.xlu0 %2791
      %2795 = vset.pattern.permute.xlu0 0
      %2796 = vperm.xlu0 %2795, %v2246
      %v2797 = vpop.permute.xlu0 %2796
      %2800 = vset.pattern.permute.xlu0 0
      %2801 = vperm.xlu0 %2800, %v2247
      %v2802 = vpop.permute.xlu0 %2801
      %2805 = vset.pattern.permute.xlu0 0
      %2806 = vperm.xlu0 %2805, %v2248
      %v2807 = vpop.permute.xlu0 %2806
      %2810 = vset.pattern.permute.xlu0 0
      %2811 = vperm.xlu0 %2810, %v2249
      %v2812 = vpop.permute.xlu0 %2811
      %2815 = vset.pattern.permute.xlu0 0
      %2816 = vperm.xlu0 %2815, %v2250
      %v2817 = vpop.permute.xlu0 %2816
      %2820 = vset.pattern.permute.xlu0 0
      %2821 = vperm.xlu0 %2820, %v2251
      %v2822 = vpop.permute.xlu0 %2821
      %2825 = vset.pattern.permute.xlu0 0
      %2826 = vperm.xlu0 %2825, %v2252
      %v2827 = vpop.permute.xlu0 %2826
      %2830 = vset.pattern.permute.xlu0 0
      %2831 = vperm.xlu0 %2830, %v2253
      %v2832 = vpop.permute.xlu0 %2831
      %2835 = vset.pattern.permute.xlu0 0
      %2836 = vperm.xlu0 %2835, %v2254
      %v2837 = vpop.permute.xlu0 %2836
      %2840 = vset.pattern.permute.xlu0 0
      %2841 = vperm.xlu0 %2840, %v2255
      %v2842 = vpop.permute.xlu0 %2841
      %2845 = vset.pattern.permute.xlu0 0
      %2846 = vperm.xlu0 %2845, %v2256
      %v2847 = vpop.permute.xlu0 %2846
      %2850 = vset.pattern.permute.xlu0 0
      %2851 = vperm.xlu0 %2850, %v2257
      %v2852 = vpop.permute.xlu0 %2851
      %2855 = vset.pattern.permute.xlu0 0
      %2856 = vperm.xlu0 %2855, %v2258
      %v2857 = vpop.permute.xlu0 %2856
      %2860 = vset.pattern.permute.xlu0 0
      %2861 = vperm.xlu0 %2860, %v2259
      %v2862 = vpop.permute.xlu0 %2861
      %2865 = vset.pattern.permute.xlu0 0
      %2866 = vperm.xlu0 %2865, %v2260
      %v2867 = vpop.permute.xlu0 %2866
      %2870 = vset.pattern.permute.xlu0 0
      %2871 = vperm.xlu0 %2870, %v2261
      %v2872 = vpop.permute.xlu0 %2871
      %2875 = vset.pattern.permute.xlu0 0
      %2876 = vperm.xlu0 %2875, %v2262
      %v2877 = vpop.permute.xlu0 %2876
      %2880 = vset.pattern.permute.xlu0 0
      %2881 = vperm.xlu0 %2880, %v2263
      %v2882 = vpop.permute.xlu0 %2881
      %2885 = vset.pattern.permute.xlu0 0
      %2886 = vperm.xlu0 %2885, %v2264
      %v2887 = vpop.permute.xlu0 %2886
      %2890 = vset.pattern.permute.xlu0 0
      %2891 = vperm.xlu0 %2890, %v2265
      %v2892 = vpop.permute.xlu0 %2891
      %2895 = vset.pattern.permute.xlu0 0
      %2896 = vperm.xlu0 %2895, %v2266
      %v2897 = vpop.permute.xlu0 %2896
      %2900 = vset.pattern.permute.xlu0 0
      %2901 = vperm.xlu0 %2900, %v2267
      %v2902 = vpop.permute.xlu0 %2901
      %2905 = vset.pattern.permute.xlu0 0
      %2906 = vperm.xlu0 %2905, %v2268
      %v2907 = vpop.permute.xlu0 %2906
      %2910 = vset.pattern.permute.xlu0 0
      %2911 = vperm.xlu0 %2910, %v2269
      %v2912 = vpop.permute.xlu0 %2911
      %2915 = vset.pattern.permute.xlu0 0
      %2916 = vperm.xlu0 %2915, %v2270
      %v2917 = vpop.permute.xlu0 %2916
      %2920 = vset.pattern.permute.xlu0 0
      %2921 = vperm.xlu0 %2920, %v2271
      %v2922 = vpop.permute.xlu0 %2921
      %2925 = vset.pattern.permute.xlu0 0
      %2926 = vperm.xlu0 %2925, %v2272
      %v2927 = vpop.permute.xlu0 %2926
      %2930 = vset.pattern.permute.xlu0 0
      %2931 = vperm.xlu0 %2930, %v2273
      %v2932 = vpop.permute.xlu0 %2931
      %2935 = vset.pattern.permute.xlu0 0
      %2936 = vperm.xlu0 %2935, %v2274
      %v2937 = vpop.permute.xlu0 %2936
      %2940 = vset.pattern.permute.xlu0 0
      %2941 = vperm.xlu0 %2940, %v2275
      %v2942 = vpop.permute.xlu0 %2941
      %2945 = vset.pattern.permute.xlu0 0
      %2946 = vperm.xlu0 %2945, %v2276
      %v2947 = vpop.permute.xlu0 %2946
      %2950 = vset.pattern.permute.xlu0 0
      %2951 = vperm.xlu0 %2950, %v2277
      %v2952 = vpop.permute.xlu0 %2951
      %2955 = vset.pattern.permute.xlu0 0
      %2956 = vperm.xlu0 %2955, %v2278
      %v2957 = vpop.permute.xlu0 %2956
      %2960 = vset.pattern.permute.xlu0 0
      %2961 = vperm.xlu0 %2960, %v2279
      %v2962 = vpop.permute.xlu0 %2961
      %2965 = vset.pattern.permute.xlu0 0
      %2966 = vperm.xlu0 %2965, %v2280
      %v2967 = vpop.permute.xlu0 %2966
      %2970 = vset.pattern.permute.xlu0 0
      %2971 = vperm.xlu0 %2970, %v2281
      %v2972 = vpop.permute.xlu0 %2971
      %2975 = vset.pattern.permute.xlu0 0
      %2976 = vperm.xlu0 %2975, %v2282
      %v2977 = vpop.permute.xlu0 %2976
      %2980 = vset.pattern.permute.xlu0 0
      %2981 = vperm.xlu0 %2980, %v2283
      %v2982 = vpop.permute.xlu0 %2981
      %2985 = vset.pattern.permute.xlu0 0
      %2986 = vperm.xlu0 %2985, %v2284
      %v2987 = vpop.permute.xlu0 %2986
      %2990 = vset.pattern.permute.xlu0 0
      %2991 = vperm.xlu0 %2990, %v2285
      %v2992 = vpop.permute.xlu0 %2991
      %2995 = vset.pattern.permute.xlu0 0
      %2996 = vperm.xlu0 %2995, %v2286
      %v2997 = vpop.permute.xlu0 %2996
      %3000 = vset.pattern.permute.xlu0 0
      %3001 = vperm.xlu0 %3000, %v2287
      %v3002 = vpop.permute.xlu0 %3001
      %3005 = vset.pattern.permute.xlu0 0
      %3006 = vperm.xlu0 %3005, %v2288
      %v3007 = vpop.permute.xlu0 %3006
      %3010 = vset.pattern.permute.xlu0 0
      %3011 = vperm.xlu0 %3010, %v2289
      %v3012 = vpop.permute.xlu0 %3011
      %3015 = vset.pattern.permute.xlu0 0
      %3016 = vperm.xlu0 %3015, %v2290
      %v3017 = vpop.permute.xlu0 %3016
      %3020 = vset.pattern.permute.xlu0 0
      %3021 = vperm.xlu0 %3020, %v2291
      %v3022 = vpop.permute.xlu0 %3021
      %3025 = vset.pattern.permute.xlu0 0
      %3026 = vperm.xlu0 %3025, %v2292
      %v3027 = vpop.permute.xlu0 %3026
      %3030 = vset.pattern.permute.xlu0 0
      %3031 = vperm.xlu0 %3030, %v2293
      %v3032 = vpop.permute.xlu0 %3031
      %3035 = vset.pattern.permute.xlu0 0
      %3036 = vperm.xlu0 %3035, %v2294
      %v3037 = vpop.permute.xlu0 %3036
      %3040 = vset.pattern.permute.xlu0 0
      %3041 = vperm.xlu0 %3040, %v2295
      %v3042 = vpop.permute.xlu0 %3041
      %3045 = vset.pattern.permute.xlu0 0
      %3046 = vperm.xlu0 %3045, %v2296
      %v3047 = vpop.permute.xlu0 %3046
      %3050 = vset.pattern.permute.xlu0 0
      %3051 = vperm.xlu0 %3050, %v2297
      %v3052 = vpop.permute.xlu0 %3051
      %3055 = vset.pattern.permute.xlu0 0
      %3056 = vperm.xlu0 %3055, %v2298
      %v3057 = vpop.permute.xlu0 %3056
      %3060 = vset.pattern.permute.xlu0 0
      %3061 = vperm.xlu0 %3060, %v2299
      %v3062 = vpop.permute.xlu0 %3061
      %3065 = vset.pattern.permute.xlu0 0
      %3066 = vperm.xlu0 %3065, %v2300
      %v3067 = vpop.permute.xlu0 %3066
      %3070 = vset.pattern.permute.xlu0 0
      %3071 = vperm.xlu0 %3070, %v2301
      %v3072 = vpop.permute.xlu0 %3071
      %3075 = vset.pattern.permute.xlu0 0
      %3076 = vperm.xlu0 %3075, %v2302
      %v3077 = vpop.permute.xlu0 %3076
      %3080 = vset.pattern.permute.xlu0 0
      %3081 = vperm.xlu0 %3080, %v2303
      %v3082 = vpop.permute.xlu0 %3081
      %3085 = vset.pattern.permute.xlu0 0
      %3086 = vperm.xlu0 %3085, %v2304
      %v3087 = vpop.permute.xlu0 %3086
      %3090 = vset.pattern.permute.xlu0 0
      %3091 = vperm.xlu0 %3090, %v2305
      %v3092 = vpop.permute.xlu0 %3091
      %3095 = vset.pattern.permute.xlu0 0
      %3096 = vperm.xlu0 %3095, %v2306
      %v3097 = vpop.permute.xlu0 %3096
      %v3099 = vadd.f32 %v2667, %v2742
      %v3100 = vadd.f32 %v2668, %v2747
      %v3101 = vadd.f32 %v2669, %v2752
      %v3102 = vadd.f32 %v2670, %v2757
      %v3103 = vadd.f32 %v2671, %v2762
      %v3104 = vadd.f32 %v2672, %v2767
      %v3105 = vadd.f32 %v2673, %v2772
      %v3106 = vadd.f32 %v2674, %v2777
      %v3107 = vadd.f32 %v2675, %v2782
      %v3108 = vadd.f32 %v2676, %v2787
      %v3109 = vadd.f32 %v2677, %v2792
      %v3110 = vadd.f32 %v2678, %v2797
      %v3111 = vadd.f32 %v2679, %v2802
      %v3112 = vadd.f32 %v2680, %v2807
      %v3113 = vadd.f32 %v2681, %v2812
      %v3114 = vadd.f32 %v2682, %v2817
      %v3115 = vadd.f32 %v2683, %v2822
      %v3116 = vadd.f32 %v2684, %v2827
      %v3117 = vadd.f32 %v2685, %v2832
      %v3118 = vadd.f32 %v2686, %v2837
      %v3119 = vadd.f32 %v2687, %v2842
      %v3120 = vadd.f32 %v2688, %v2847
      %v3121 = vadd.f32 %v2689, %v2852
      %v3122 = vadd.f32 %v2690, %v2857
      %v3123 = vadd.f32 %v2691, %v2862
      %v3124 = vadd.f32 %v2692, %v2867
      %v3125 = vadd.f32 %v2693, %v2872
      %v3126 = vadd.f32 %v2694, %v2877
      %v3127 = vadd.f32 %v2695, %v2882
      %v3128 = vadd.f32 %v2696, %v2887
      %v3129 = vadd.f32 %v2697, %v2892
      %v3130 = vadd.f32 %v2698, %v2897
      %v3131 = vadd.f32 %v2699, %v2902
      %v3132 = vadd.f32 %v2700, %v2907
      %v3133 = vadd.f32 %v2701, %v2912
      %v3134 = vadd.f32 %v2702, %v2917
      %v3135 = vadd.f32 %v2703, %v2922
      %v3136 = vadd.f32 %v2704, %v2927
      %v3137 = vadd.f32 %v2705, %v2932
      %v3138 = vadd.f32 %v2706, %v2937
      %v3139 = vadd.f32 %v2707, %v2942
      %v3140 = vadd.f32 %v2708, %v2947
      %v3141 = vadd.f32 %v2709, %v2952
      %v3142 = vadd.f32 %v2710, %v2957
      %v3143 = vadd.f32 %v2711, %v2962
      %v3144 = vadd.f32 %v2712, %v2967
      %v3145 = vadd.f32 %v2713, %v2972
      %v3146 = vadd.f32 %v2714, %v2977
      %v3147 = vadd.f32 %v2715, %v2982
      %v3148 = vadd.f32 %v2716, %v2987
      %v3149 = vadd.f32 %v2717, %v2992
      %v3150 = vadd.f32 %v2718, %v2997
      %v3151 = vadd.f32 %v2719, %v3002
      %v3152 = vadd.f32 %v2720, %v3007
      %v3153 = vadd.f32 %v2721, %v3012
      %v3154 = vadd.f32 %v2722, %v3017
      %v3155 = vadd.f32 %v2723, %v3022
      %v3156 = vadd.f32 %v2724, %v3027
      %v3157 = vadd.f32 %v2725, %v3032
      %v3158 = vadd.f32 %v2726, %v3037
      %v3159 = vadd.f32 %v2727, %v3042
      %v3160 = vadd.f32 %v2728, %v3047
      %v3161 = vadd.f32 %v2729, %v3052
      %v3162 = vadd.f32 %v2730, %v3057
      %v3163 = vadd.f32 %v2731, %v3062
      %v3164 = vadd.f32 %v2732, %v3067
      %v3165 = vadd.f32 %v2733, %v3072
      %v3166 = vadd.f32 %v2734, %v3077
      %v3167 = vadd.f32 %v2735, %v3082
      %v3168 = vadd.f32 %v2736, %v3087
      %v3169 = vadd.f32 %v2737, %v3092
      %v3170 = vadd.f32 %v2738, %v3097
      %v3171 = vmax.f32 %v3099, 0.0
      %v3172 = vmax.f32 %v3100, 0.0
      %v3173 = vmax.f32 %v3101, 0.0
      %v3174 = vmax.f32 %v3102, 0.0
      %v3175 = vmax.f32 %v3103, 0.0
      %v3176 = vmax.f32 %v3104, 0.0
      %v3177 = vmax.f32 %v3105, 0.0
      %v3178 = vmax.f32 %v3106, 0.0
      %v3179 = vmax.f32 %v3107, 0.0
      %v3180 = vmax.f32 %v3108, 0.0
      %v3181 = vmax.f32 %v3109, 0.0
      %v3182 = vmax.f32 %v3110, 0.0
      %v3183 = vmax.f32 %v3111, 0.0
      %v3184 = vmax.f32 %v3112, 0.0
      %v3185 = vmax.f32 %v3113, 0.0
      %v3186 = vmax.f32 %v3114, 0.0
      %v3187 = vmax.f32 %v3115, 0.0
      %v3188 = vmax.f32 %v3116, 0.0
      %v3189 = vmax.f32 %v3117, 0.0
      %v3190 = vmax.f32 %v3118, 0.0
      %v3191 = vmax.f32 %v3119, 0.0
      %v3192 = vmax.f32 %v3120, 0.0
      %v3193 = vmax.f32 %v3121, 0.0
      %v3194 = vmax.f32 %v3122, 0.0
      %v3195 = vmax.f32 %v3123, 0.0
      %v3196 = vmax.f32 %v3124, 0.0
      %v3197 = vmax.f32 %v3125, 0.0
      %v3198 = vmax.f32 %v3126, 0.0
      %v3199 = vmax.f32 %v3127, 0.0
      %v3200 = vmax.f32 %v3128, 0.0
      %v3201 = vmax.f32 %v3129, 0.0
      %v3202 = vmax.f32 %v3130, 0.0
      %v3203 = vmax.f32 %v3131, 0.0
      %v3204 = vmax.f32 %v3132, 0.0
      %v3205 = vmax.f32 %v3133, 0.0
      %v3206 = vmax.f32 %v3134, 0.0
      %v3207 = vmax.f32 %v3135, 0.0
      %v3208 = vmax.f32 %v3136, 0.0
      %v3209 = vmax.f32 %v3137, 0.0
      %v3210 = vmax.f32 %v3138, 0.0
      %v3211 = vmax.f32 %v3139, 0.0
      %v3212 = vmax.f32 %v3140, 0.0
      %v3213 = vmax.f32 %v3141, 0.0
      %v3214 = vmax.f32 %v3142, 0.0
      %v3215 = vmax.f32 %v3143, 0.0
      %v3216 = vmax.f32 %v3144, 0.0
      %v3217 = vmax.f32 %v3145, 0.0
      %v3218 = vmax.f32 %v3146, 0.0
      %v3219 = vmax.f32 %v3147, 0.0
      %v3220 = vmax.f32 %v3148, 0.0
      %v3221 = vmax.f32 %v3149, 0.0
      %v3222 = vmax.f32 %v3150, 0.0
      %v3223 = vmax.f32 %v3151, 0.0
      %v3224 = vmax.f32 %v3152, 0.0
      %v3225 = vmax.f32 %v3153, 0.0
      %v3226 = vmax.f32 %v3154, 0.0
      %v3227 = vmax.f32 %v3155, 0.0
      %v3228 = vmax.f32 %v3156, 0.0
      %v3229 = vmax.f32 %v3157, 0.0
      %v3230 = vmax.f32 %v3158, 0.0
      %v3231 = vmax.f32 %v3159, 0.0
      %v3232 = vmax.f32 %v3160, 0.0
      %v3233 = vmax.f32 %v3161, 0.0
      %v3234 = vmax.f32 %v3162, 0.0
      %v3235 = vmax.f32 %v3163, 0.0
      %v3236 = vmax.f32 %v3164, 0.0
      %v3237 = vmax.f32 %v3165, 0.0
      %v3238 = vmax.f32 %v3166, 0.0
      %v3239 = vmax.f32 %v3167, 0.0
      %v3240 = vmax.f32 %v3168, 0.0
      %v3241 = vmax.f32 %v3169, 0.0
      %v3242 = vmax.f32 %v3170, 0.0
      %3243 = vst.msk [vmem:[%s216] sm:$0xff] %vm290, %v3171
      %3244 = vst.msk [vmem:[%s216 + $0x8] sm:$0xff] %vm290, %v3172
      %3245 = vst.msk [vmem:[%s216 + $0x10] sm:$0xff] %vm290, %v3173
      %3246 = vst.msk [vmem:[%s216 + $0x18] sm:$0xff] %vm290, %v3174
      %3247 = vst.msk [vmem:[%s216 + $0x20] sm:$0xff] %vm290, %v3175
      %3248 = vst.msk [vmem:[%s216 + $0x28] sm:$0xff] %vm290, %v3176
      %3249 = vst.msk [vmem:[%s216 + $0x30] sm:$0xff] %vm290, %v3177
      %3250 = vst.msk [vmem:[%s216 + $0x38] sm:$0xff] %vm290, %v3178
      %3251 = vst.msk [vmem:[%s216 + $0x40] sm:$0xff] %vm290, %v3179
      %3252 = vst.msk [vmem:[%s216 + $0x48] sm:$0xff] %vm290, %v3180
      %3253 = vst.msk [vmem:[%s216 + $0x50] sm:$0xff] %vm290, %v3181
      %3254 = vst.msk [vmem:[%s216 + $0x58] sm:$0xff] %vm290, %v3182
      %3255 = vst.msk [vmem:[%s216 + $0x60] sm:$0xff] %vm290, %v3183
      %3256 = vst.msk [vmem:[%s216 + $0x68] sm:$0xff] %vm290, %v3184
      %3257 = vst.msk [vmem:[%s216 + $0x70] sm:$0xff] %vm290, %v3185
      %3258 = vst.msk [vmem:[%s216 + $0x78] sm:$0xff] %vm290, %v3186
      %3259 = vst.msk [vmem:[%s216 + $0x80] sm:$0xff] %vm290, %v3187
      %3260 = vst.msk [vmem:[%s216 + $0x88] sm:$0xff] %vm290, %v3188
      %3261 = vst.msk [vmem:[%s216 + $0x90] sm:$0xff] %vm290, %v3189
      %3262 = vst.msk [vmem:[%s216 + $0x98] sm:$0xff] %vm290, %v3190
      %3263 = vst.msk [vmem:[%s216 + $0xa0] sm:$0xff] %vm290, %v3191
      %3264 = vst.msk [vmem:[%s216 + $0xa8] sm:$0xff] %vm290, %v3192
      %3265 = vst.msk [vmem:[%s216 + $0xb0] sm:$0xff] %vm290, %v3193
      %3266 = vst.msk [vmem:[%s216 + $0xb8] sm:$0xff] %vm290, %v3194
      %3267 = vst.msk [vmem:[%s216 + $0xc0] sm:$0xff] %vm290, %v3195
      %3268 = vst.msk [vmem:[%s216 + $0xc8] sm:$0xff] %vm290, %v3196
      %3269 = vst.msk [vmem:[%s216 + $0xd0] sm:$0xff] %vm290, %v3197
      %3270 = vst.msk [vmem:[%s216 + $0xd8] sm:$0xff] %vm290, %v3198
      %3271 = vst.msk [vmem:[%s216 + $0xe0] sm:$0xff] %vm290, %v3199
      %3272 = vst.msk [vmem:[%s216 + $0xe8] sm:$0xff] %vm290, %v3200
      %3273 = vst.msk [vmem:[%s216 + $0xf0] sm:$0xff] %vm290, %v3201
      %3274 = vst.msk [vmem:[%s216 + $0xf8] sm:$0xff] %vm290, %v3202
      %3275 = vst.msk [vmem:[%s216 + $0x100] sm:$0xff] %vm290, %v3203
      %3276 = vst.msk [vmem:[%s216 + $0x108] sm:$0xff] %vm290, %v3204
      %3277 = vst.msk [vmem:[%s216 + $0x110] sm:$0xff] %vm290, %v3205
      %3278 = vst.msk [vmem:[%s216 + $0x118] sm:$0xff] %vm290, %v3206
      %3279 = vst.msk [vmem:[%s216 + $0x120] sm:$0xff] %vm290, %v3207
      %3280 = vst.msk [vmem:[%s216 + $0x128] sm:$0xff] %vm290, %v3208
      %3281 = vst.msk [vmem:[%s216 + $0x130] sm:$0xff] %vm290, %v3209
      %3282 = vst.msk [vmem:[%s216 + $0x138] sm:$0xff] %vm290, %v3210
      %3283 = vst.msk [vmem:[%s216 + $0x140] sm:$0xff] %vm290, %v3211
      %3284 = vst.msk [vmem:[%s216 + $0x148] sm:$0xff] %vm290, %v3212
      %3285 = vst.msk [vmem:[%s216 + $0x150] sm:$0xff] %vm290, %v3213
      %3286 = vst.msk [vmem:[%s216 + $0x158] sm:$0xff] %vm290, %v3214
      %3287 = vst.msk [vmem:[%s216 + $0x160] sm:$0xff] %vm290, %v3215
      %3288 = vst.msk [vmem:[%s216 + $0x168] sm:$0xff] %vm290, %v3216
      %3289 = vst.msk [vmem:[%s216 + $0x170] sm:$0xff] %vm290, %v3217
      %3290 = vst.msk [vmem:[%s216 + $0x178] sm:$0xff] %vm290, %v3218
      %3291 = vst.msk [vmem:[%s216 + $0x180] sm:$0xff] %vm290, %v3219
      %3292 = vst.msk [vmem:[%s216 + $0x188] sm:$0xff] %vm290, %v3220
      %3293 = vst.msk [vmem:[%s216 + $0x190] sm:$0xff] %vm290, %v3221
      %3294 = vst.msk [vmem:[%s216 + $0x198] sm:$0xff] %vm290, %v3222
      %3295 = vst.msk [vmem:[%s216 + $0x1a0] sm:$0xff] %vm290, %v3223
      %3296 = vst.msk [vmem:[%s216 + $0x1a8] sm:$0xff] %vm290, %v3224
      %3297 = vst.msk [vmem:[%s216 + $0x1b0] sm:$0xff] %vm290, %v3225
      %3298 = vst.msk [vmem:[%s216 + $0x1b8] sm:$0xff] %vm290, %v3226
      %3299 = vst.msk [vmem:[%s216 + $0x1c0] sm:$0xff] %vm290, %v3227
      %3300 = vst.msk [vmem:[%s216 + $0x1c8] sm:$0xff] %vm290, %v3228
      %3301 = vst.msk [vmem:[%s216 + $0x1d0] sm:$0xff] %vm290, %v3229
      %3302 = vst.msk [vmem:[%s216 + $0x1d8] sm:$0xff] %vm290, %v3230
      %3303 = vst.msk [vmem:[%s216 + $0x1e0] sm:$0xff] %vm290, %v3231
      %3304 = vst.msk [vmem:[%s216 + $0x1e8] sm:$0xff] %vm290, %v3232
      %3305 = vst.msk [vmem:[%s216 + $0x1f0] sm:$0xff] %vm290, %v3233
      %3306 = vst.msk [vmem:[%s216 + $0x1f8] sm:$0xff] %vm290, %v3234
      %3307 = vst.msk [vmem:[%s216 + $0x200] sm:$0xff] %vm290, %v3235
      %3308 = vst.msk [vmem:[%s216 + $0x208] sm:$0xff] %vm290, %v3236
      %3309 = vst.msk [vmem:[%s216 + $0x210] sm:$0xff] %vm290, %v3237
      %3310 = vst.msk [vmem:[%s216 + $0x218] sm:$0xff] %vm290, %v3238
      %3311 = vst.msk [vmem:[%s216 + $0x220] sm:$0xff] %vm290, %v3239
      %3312 = vst.msk [vmem:[%s216 + $0x228] sm:$0xff] %vm290, %v3240
      %3313 = vst.msk [vmem:[%s216 + $0x230] sm:$0xff] %vm290, %v3241
      %3314 = vst.msk [vmem:[%s216 + $0x238] sm:$0xff] %vm290, %v3242
      %s3315 = smul.u32 72, %s14
      %p3316 = scmp.lt.s32.totalorder %s3315, 143
      %s3317 = scalar_select %p3316, %s3315, 143
      %s3318 = smul.addr %s3317, 8
      %s3319 = scalar_lea.vmem %s3, %s3318
      // Predicated region
      $region33: #{tpu_custom_call.1} parent=31 // pred_check
        %p3320 = pneg %p110
      $region34: #{tpu_custom_call.1} parent=31 // pred_check_branch
        %3322 = sbr.rel (%p3320) target = $region36
      $region35: #{tpu_custom_call.1} parent=31 // pred_region
        %s3323 = smul.u32 72, %s14
      $region36: #{tpu_custom_call.1} parent=31 // pred_fallthru
        _
    $region32: #{tpu_custom_call.1} parent=5 // pred_fallthru
      _
    %p3324 = scmp.le.s32.totalorder 2, %s9
    // Predicated region
    $region37: #{tpu_custom_call.1} parent=5 // pred_check
      %p3325 = pneg %p3324
    $region38: #{tpu_custom_call.1} parent=5 // pred_check_branch
      %3327 = sbr.rel (%p3325) target = $region40
    $region39: #{tpu_custom_call.1} parent=5 // pred_region
      %s3328 = ssub.s32 %s9, 2
      // Predicated region
      $region41: #{tpu_custom_call.1} parent=39 // pred_check
        %p3329 = pneg %p116
      $region42: #{tpu_custom_call.1} parent=39 // pred_check_branch
        %3331 = sbr.rel (%p3329) target = $region44
      $region43: #{tpu_custom_call.1} parent=39 // pred_region
        %s3332 = smul.u32 72, %s15
        %p3333 = scmp.lt.s32.totalorder %s3332, 143
        %s3334 = scalar_select %p3333, %s3332, 143
        %s3335 = smul.addr %s3334, 8
        %s3336 = scalar_lea.vmem %s3, %s3335
      $region44: #{tpu_custom_call.1} parent=39 // pred_fallthru
        _
    $region40: #{tpu_custom_call.1} parent=5 // pred_fallthru
      _
  $region6: #{tpu_custom_call.1} parent=0 // loop_footer
    %s13 = sadd.s32 1, %s9
  $region7: #{tpu_custom_call.1} parent=0 // loop_footer_branch
    %8 = sbr.rel target = $region3
  $region8: #{tpu_custom_call.1} parent=0 // loop_exit
    _

</llo_original>
